<compile_context>
chip_gen: v5e
topology: v5e:2x2
jax: 0.10.0
libtpu: 0.0.40
codegen_flags: <defaults>
</compile_context>

<pallas_src>
import functools

import jax
import jax.numpy as jnp
from jax.experimental import pallas as pl
from jax.experimental.pallas import tpu as pltpu


def _layer_norm(v, eps=1e-5):
    # F.layer_norm over the last dim, no affine params (matches reference).
    mu = jnp.mean(v, axis=-1, keepdims=True)
    var = jnp.mean((v - mu) ** 2, axis=-1, keepdims=True)
    return (v - mu) * jax.lax.rsqrt(var + eps)


def fused_proj_kernel(h_ref, x_ref, wh_ref, wx_ref, hx_ref):
    # Per-row-tile, all heads at once (lane-dense 128-wide outputs):
    #   hh_all = h @ Wh_all   [tm, H*D]
    #   xx_all = x @ Wx_all   [tm, H*D]
    hh = jnp.dot(h_ref[...], wh_ref[...], preferred_element_type=jnp.float32)
    xx = jnp.dot(x_ref[...], wx_ref[...], preferred_element_type=jnp.float32)
    hx_ref[...] = jnp.concatenate([hh, xx], axis=-1).astype(hx_ref.dtype)


def gated_block_kernel(a_ref, hx_ref, h_ref, ball_ref,
                       w1_ref, b1_ref, w2_ref, b2_ref,
                       o_ref, *, n_heads, d_out):
    hd = n_heads * d_out

    # Single lane-dense MXU matmul covering all heads of both GCN paths:
    #   prop = A_tile @ [hh_all | xx_all]  -> [tm, 2*H*D], f32 accumulation.
    prop = jnp.dot(a_ref[...], hx_ref[...], preferred_element_type=jnp.float32)
    prop = prop + ball_ref[...]                     # fused GCN biases, one add

    hh = prop[:, :hd]                               # A @ (h @ Wh) + bh, all heads
    xx = prop[:, hd:]                               # A @ (x @ Wx) + bx, all heads

    # TODO(synk): placeholder parameter-free gate: gate(h, x) = sigmoid(x) * h.
    gated = jax.nn.sigmoid(xx) * hh                 # [tm, H*D]

    # Mean over heads: sum static D-wide lane slices, scale once.
    acc = gated[:, 0:d_out]
    for i in range(1, n_heads):
        acc = acc + gated[:, i * d_out:(i + 1) * d_out]
    h_mh = acc * (1.0 / n_heads)

    h0 = h_ref[...]                                 # row tile of original h (f32)
    h1 = _layer_norm(h_mh + h0)                     # residual + LayerNorm

    # ff = Linear -> ReLU -> Linear (bf16 MXU operands, f32 accumulate/elementwise)
    ff = jnp.dot(h1.astype(w1_ref.dtype), w1_ref[...],
                 preferred_element_type=jnp.float32) + b1_ref[...]
    ff = jnp.maximum(ff, 0.0)
    ff = jnp.dot(ff.astype(w2_ref.dtype), w2_ref[...],
                 preferred_element_type=jnp.float32) + b2_ref[...]

    h2 = _layer_norm(ff + h1)                       # residual + LayerNorm

    # Lane-dense store: pad features up to the (128-multiple) output width.
    pad = o_ref.shape[-1] - d_out
    if pad:
        h2 = jnp.concatenate(
            [h2, jnp.zeros((h2.shape[0], pad), jnp.float32)], axis=-1)
    o_ref[...] = h2.astype(o_ref.dtype)


def gated_block(a_norm, h, x, wh, bh, wx, bx, w1, b1, w2, b2, *, tm=128):
    n, d = h.shape
    _, c = x.shape
    n_heads = wh.shape[0]
    hd = n_heads * d
    tm = min(tm, n)
    grid = (pl.cdiv(n, tm),)

    # --- fuse per-head weights into lane-dense bf16 MXU operands ---
    wh_all = jnp.transpose(wh, (1, 0, 2)).reshape(d, hd).astype(jnp.bfloat16)
    wx_all = jnp.transpose(wx, (1, 0, 2)).reshape(c, hd).astype(jnp.bfloat16)
    b_all = jnp.concatenate(
        [bh.reshape(1, hd), bx.reshape(1, hd)], axis=-1).astype(jnp.float32)
    b1r = b1.reshape(1, d).astype(jnp.float32)
    b2r = b2.reshape(1, d).astype(jnp.float32)
    w1b = w1.astype(jnp.bfloat16)
    w2b = w2.astype(jnp.bfloat16)
    a_bf = a_norm.astype(jnp.bfloat16)
    h_bf = h.astype(jnp.bfloat16)
    x_bf = x.astype(jnp.bfloat16)
    h_f32 = h.astype(jnp.float32)

    # --- kernel 1: all-head projections HX = [hh_all | xx_all], row-tiled ---
    hx = pl.pallas_call(
        fused_proj_kernel,
        out_shape=jax.ShapeDtypeStruct((n, 2 * hd), jnp.bfloat16),
        grid_spec=pltpu.PrefetchScalarGridSpec(
            num_scalar_prefetch=0, grid=grid,
            in_specs=[pl.BlockSpec((tm, d), lambda i: (i, 0)),
                      pl.BlockSpec((tm, c), lambda i: (i, 0)),
                      pl.BlockSpec((d, hd), lambda i: (0, 0)),
                      pl.BlockSpec((c, hd), lambda i: (0, 0))],
            out_specs=pl.BlockSpec((tm, 2 * hd), lambda i: (i, 0))),
        compiler_params=pltpu.CompilerParams(
            dimension_semantics=("parallel",)),
    )(h_bf, x_bf, wh_all, wx_all)

    # --- kernel 2: A_tile @ HX + gate/mean + residual/LN + FF + residual/LN ---
    d_pad = ((d + 127) // 128) * 128           # lane-dense output width
    # Scoped VMEM sized to the chosen tiles (double-buffered) + residents + slack.
    bytes_per_step = 2 * (tm * n * 2           # A row tile (bf16)
                          + n * 2 * hd * 2     # HX resident (bf16)
                          + tm * d * 4         # h row tile (f32)
                          + tm * d_pad * 4)    # output tile (f32)
    bytes_consts = (2 * hd + 2 * d) * 4 + 2 * d * d * 2
    vmem_bytes = min(int(1.5 * (bytes_per_step + bytes_consts)) + (2 << 20),
                     48 * 1024 * 1024)
    kern = functools.partial(gated_block_kernel, n_heads=n_heads, d_out=d)
    out = pl.pallas_call(
        kern,
        out_shape=jax.ShapeDtypeStruct((n, d_pad), jnp.float32),
        grid_spec=pltpu.PrefetchScalarGridSpec(
            num_scalar_prefetch=0, grid=grid,
            in_specs=[pl.BlockSpec((tm, n), lambda i: (i, 0)),        # A row tile
                      pl.BlockSpec((n, 2 * hd), lambda i: (0, 0)),    # HX (resident)
                      pl.BlockSpec((tm, d), lambda i: (i, 0)),        # h row tile
                      pl.BlockSpec((1, 2 * hd), lambda i: (0, 0)),    # fused biases
                      pl.BlockSpec((d, d), lambda i: (0, 0)),         # w1
                      pl.BlockSpec((1, d), lambda i: (0, 0)),         # b1
                      pl.BlockSpec((d, d), lambda i: (0, 0)),         # w2
                      pl.BlockSpec((1, d), lambda i: (0, 0))],        # b2
            out_specs=pl.BlockSpec((tm, d_pad), lambda i: (i, 0))),
        compiler_params=pltpu.CompilerParams(
            dimension_semantics=("parallel",),
            vmem_limit_bytes=vmem_bytes),
    )(a_bf, hx, h_f32, b_all, w1b, b1r, w2b, b2r)

    return out[:, :d]


def build_norm_adj(edge_index, n):
    """Dense GCN-normalized adjacency: D^-1/2 (A + I) D^-1/2.

    .set() dedups repeated edges; jnp.maximum with I dedups pre-existing self loops.
    """
    src, dst = edge_index[0], edge_index[1]
    A = jnp.zeros((n, n), jnp.float32).at[dst, src].set(1.0)
    A = jnp.maximum(A, jnp.eye(n, dtype=jnp.float32))
    deg = jnp.sum(A, axis=1)
    dinv = jax.lax.rsqrt(jnp.maximum(deg, 1.0))
    return dinv[:, None] * A * dinv[None, :]


if __name__ == "__main__":
    # nodes, n_input, n_output, n_heads, edges
    N, C, D, H, E = 256, 8, 32, 4, 1024

    key = jax.random.PRNGKey(0)
    ks = jax.random.split(key, 12)

    h = jax.random.normal(ks[0], (N, D), jnp.float32)
    x = jax.random.normal(ks[1], (N, C), jnp.float32)
    src = jax.random.randint(ks[2], (E,), 0, N)
    dst = jax.random.randint(ks[3], (E,), 0, N)
    edge_index = jnp.stack([src, dst], axis=0)

    # Deterministic parameter init (GCNConv / Linear weights, stored as [in, out]).
    wh = jax.random.normal(ks[4], (H, D, D), jnp.float32) * 0.1
    bh = jax.random.normal(ks[5], (H, D), jnp.float32) * 0.1
    wx = jax.random.normal(ks[6], (H, C, D), jnp.float32) * 0.1
    bx = jax.random.normal(ks[7], (H, D), jnp.float32) * 0.1
    w1 = jax.random.normal(ks[8], (D, D), jnp.float32) * 0.1
    b1 = jax.random.normal(ks[9], (D,), jnp.float32) * 0.1
    w2 = jax.random.normal(ks[10], (D, D), jnp.float32) * 0.1
    b2 = jax.random.normal(ks[11], (D,), jnp.float32) * 0.1

    a_norm = build_norm_adj(edge_index, N)

    fn = jax.jit(gated_block)
    out = fn(a_norm, h, x, wh, bh, wx, bx, w1, b1, w2, b2)
    jax.block_until_ready(out)
    assert out.shape == (N, D)
    assert bool(jnp.all(jnp.isfinite(out)))
    print("KERNEL_OK")
</pallas_src>

<mosaic_0001>
module attributes {stable_mosaic.version = 11 : i64} {
  func.func @fused_proj_kernel(%arg0: i32, %arg1: memref<128x32xbf16, #tpu.memory_space<vmem>>, %arg2: memref<128x8xbf16, #tpu.memory_space<vmem>>, %arg3: memref<32x128xbf16, #tpu.memory_space<vmem>>, %arg4: memref<8x128xbf16, #tpu.memory_space<vmem>>, %arg5: memref<128x256xbf16, #tpu.memory_space<vmem>>) attributes {dimension_semantics = [#tpu.dimension_semantics<parallel>], iteration_bounds = array<i64: 2>, scalar_prefetch = 0 : i64, scratch_operands = 0 : i64, tpu.core_type = #tpu.core_type<tc>, window_params = [{transform_indices = @transform_0, window_bounds = array<i64: 128, 32>}, {transform_indices = @transform_1, window_bounds = array<i64: 128, 8>}, {pipeline_mode = #tpu.pipeline_mode<synchronous>, transform_indices = @transform_2, window_bounds = array<i64: 32, 128>}, {pipeline_mode = #tpu.pipeline_mode<synchronous>, transform_indices = @transform_3, window_bounds = array<i64: 8, 128>}, {transform_indices = @transform_4, window_bounds = array<i64: 128, 256>}]} {
    %c0 = arith.constant 0 : index
    %c0_0 = arith.constant 0 : index
    %0 = vector.load %arg1[%c0, %c0_0] : memref<128x32xbf16, #tpu.memory_space<vmem>>, vector<128x32xbf16>
    %c0_1 = arith.constant 0 : index
    %c0_2 = arith.constant 0 : index
    %1 = vector.load %arg3[%c0_1, %c0_2] : memref<32x128xbf16, #tpu.memory_space<vmem>>, vector<32x128xbf16>
    %cst = arith.constant dense<0.000000e+00> : vector<128x128xf32>
    %2 = tpu.matmul %0, %1, %cst {dimension_numbers = #tpu.dot_dimension_numbers<[1], [0], [0], [1], [0, 0, 1, 1], [], []>} : vector<128x32xbf16>, vector<32x128xbf16>, vector<128x128xf32> -> vector<128x128xf32>
    %c0_3 = arith.constant 0 : index
    %c0_4 = arith.constant 0 : index
    %3 = vector.load %arg2[%c0_3, %c0_4] : memref<128x8xbf16, #tpu.memory_space<vmem>>, vector<128x8xbf16>
    %c0_5 = arith.constant 0 : index
    %c0_6 = arith.constant 0 : index
    %4 = vector.load %arg4[%c0_5, %c0_6] : memref<8x128xbf16, #tpu.memory_space<vmem>>, vector<8x128xbf16>
    %cst_7 = arith.constant dense<0.000000e+00> : vector<128x128xf32>
    %5 = tpu.matmul %3, %4, %cst_7 {dimension_numbers = #tpu.dot_dimension_numbers<[1], [0], [0], [1], [0, 0, 1, 1], [], []>} : vector<128x8xbf16>, vector<8x128xbf16>, vector<128x128xf32> -> vector<128x128xf32>
    %6 = tpu.concatenate %2, %5 in 1 : vector<128x128xf32>, vector<128x128xf32> -> vector<128x256xf32>
    %7 = arith.truncf %6 : vector<128x256xf32> to vector<128x256xbf16>
    %c0_8 = arith.constant 0 : index
    %c0_9 = arith.constant 0 : index
    %8 = vector.load %arg5[%c0_8, %c0_9] : memref<128x256xbf16, #tpu.memory_space<vmem>>, vector<128x256xbf16>
    tpu.vector_store %arg5[%c0_8, %c0_9], %7 {strides = array<i32>} : memref<128x256xbf16, #tpu.memory_space<vmem>>, vector<128x256xbf16>,
    return
  }
  func.func @transform_0(%arg0: i32) -> (i32, i32) {
    %c0_i32 = arith.constant 0 : i32
    %c0_i32_0 = arith.constant 0 : i32
    return %arg0, %c0_i32 : i32, i32
  }
  func.func @transform_1(%arg0: i32) -> (i32, i32) {
    %c0_i32 = arith.constant 0 : i32
    %c0_i32_0 = arith.constant 0 : i32
    return %arg0, %c0_i32 : i32, i32
  }
  func.func @transform_2(%arg0: i32) -> (i32, i32) {
    %c0_i32 = arith.constant 0 : i32
    %c0_i32_0 = arith.constant 0 : i32
    %c0_i32_1 = arith.constant 0 : i32
    return %c0_i32, %c0_i32_0 : i32, i32
  }
  func.func @transform_3(%arg0: i32) -> (i32, i32) {
    %c0_i32 = arith.constant 0 : i32
    %c0_i32_0 = arith.constant 0 : i32
    %c0_i32_1 = arith.constant 0 : i32
    return %c0_i32, %c0_i32_0 : i32, i32
  }
  func.func @transform_4(%arg0: i32) -> (i32, i32) {
    %c0_i32 = arith.constant 0 : i32
    %c0_i32_0 = arith.constant 0 : i32
    return %arg0, %c0_i32 : i32, i32
  }
}

module attributes {stable_mosaic.version = 11 : i64} {
  func.func @gated_block_kernel(%arg0: i32, %arg1: memref<128x256xbf16, #tpu.memory_space<vmem>>, %arg2: memref<256x256xbf16, #tpu.memory_space<vmem>>, %arg3: memref<128x32xf32, #tpu.memory_space<vmem>>, %arg4: memref<1x256xf32, #tpu.memory_space<vmem>>, %arg5: memref<32x32xbf16, #tpu.memory_space<vmem>>, %arg6: memref<1x32xf32, #tpu.memory_space<vmem>>, %arg7: memref<32x32xbf16, #tpu.memory_space<vmem>>, %arg8: memref<1x32xf32, #tpu.memory_space<vmem>>, %arg9: memref<128x128xf32, #tpu.memory_space<vmem>>) attributes {dimension_semantics = [#tpu.dimension_semantics<parallel>], iteration_bounds = array<i64: 2>, scalar_prefetch = 0 : i64, scratch_operands = 0 : i64, tpu.core_type = #tpu.core_type<tc>, window_params = [{transform_indices = @transform_0, window_bounds = array<i64: 128, 256>}, {pipeline_mode = #tpu.pipeline_mode<synchronous>, transform_indices = @transform_1, window_bounds = array<i64: 256, 256>}, {transform_indices = @transform_2, window_bounds = array<i64: 128, 32>}, {pipeline_mode = #tpu.pipeline_mode<synchronous>, transform_indices = @transform_3, window_bounds = array<i64: 1, 256>}, {pipeline_mode = #tpu.pipeline_mode<synchronous>, transform_indices = @transform_4, window_bounds = array<i64: 32, 32>}, {pipeline_mode = #tpu.pipeline_mode<synchronous>, transform_indices = @transform_5, window_bounds = array<i64: 1, 32>}, {pipeline_mode = #tpu.pipeline_mode<synchronous>, transform_indices = @transform_6, window_bounds = array<i64: 32, 32>}, {pipeline_mode = #tpu.pipeline_mode<synchronous>, transform_indices = @transform_7, window_bounds = array<i64: 1, 32>}, {transform_indices = @transform_8, window_bounds = array<i64: 128, 128>}]} {
    %c0 = arith.constant 0 : index
    %c0_0 = arith.constant 0 : index
    %0 = vector.load %arg1[%c0, %c0_0] : memref<128x256xbf16, #tpu.memory_space<vmem>>, vector<128x256xbf16>
    %c0_1 = arith.constant 0 : index
    %c0_2 = arith.constant 0 : index
    %1 = vector.load %arg2[%c0_1, %c0_2] : memref<256x256xbf16, #tpu.memory_space<vmem>>, vector<256x256xbf16>
    %cst = arith.constant dense<0.000000e+00> : vector<128x256xf32>
    %2 = tpu.matmul %0, %1, %cst {dimension_numbers = #tpu.dot_dimension_numbers<[1], [0], [0], [1], [0, 0, 1, 1], [], []>} : vector<128x256xbf16>, vector<256x256xbf16>, vector<128x256xf32> -> vector<128x256xf32>
    %c0_3 = arith.constant 0 : index
    %c0_4 = arith.constant 0 : index
    %3 = vector.load %arg4[%c0_3, %c0_4] : memref<1x256xf32, #tpu.memory_space<vmem>>, vector<1x256xf32>
    %4 = vector.broadcast %3 : vector<1x256xf32> to vector<128x256xf32>
    %5 = arith.addf %2, %4 : vector<128x256xf32>
    %6 = vector.extract_strided_slice %5 {offsets = [0, 0], sizes = [128, 128], strides = [1, 1]} : vector<128x256xf32> to vector<128x128xf32>
    %7 = vector.extract_strided_slice %5 {offsets = [0, 128], sizes = [128, 128], strides = [1, 1]} : vector<128x256xf32> to vector<128x128xf32>
    %8 = arith.negf %7 : vector<128x128xf32>
    %9 = math.exp %8 : vector<128x128xf32>
    %cst_5 = arith.constant 1.000000e+00 : f32
    %10 = vector.broadcast %cst_5 : f32 to vector<128x128xf32>
    %11 = arith.addf %10, %9 : vector<128x128xf32>
    %12 = arith.divf %10, %11 : vector<128x128xf32>
    %13 = arith.mulf %12, %6 : vector<128x128xf32>
    %14 = vector.extract_strided_slice %13 {offsets = [0, 0], sizes = [128, 32], strides = [1, 1]} : vector<128x128xf32> to vector<128x32xf32>
    %15 = vector.extract_strided_slice %13 {offsets = [0, 32], sizes = [128, 32], strides = [1, 1]} : vector<128x128xf32> to vector<128x32xf32>
    %16 = arith.addf %14, %15 : vector<128x32xf32>
    %17 = vector.extract_strided_slice %13 {offsets = [0, 64], sizes = [128, 32], strides = [1, 1]} : vector<128x128xf32> to vector<128x32xf32>
    %18 = arith.addf %16, %17 : vector<128x32xf32>
    %19 = vector.extract_strided_slice %13 {offsets = [0, 96], sizes = [128, 32], strides = [1, 1]} : vector<128x128xf32> to vector<128x32xf32>
    %20 = arith.addf %18, %19 : vector<128x32xf32>
    %cst_6 = arith.constant 2.500000e-01 : f32
    %21 = vector.broadcast %cst_6 : f32 to vector<128x32xf32>
    %22 = arith.mulf %20, %21 : vector<128x32xf32>
    %c0_7 = arith.constant 0 : index
    %c0_8 = arith.constant 0 : index
    %23 = vector.load %arg3[%c0_7, %c0_8] : memref<128x32xf32, #tpu.memory_space<vmem>>, vector<128x32xf32>
    %24 = arith.addf %22, %23 : vector<128x32xf32>
    %cst_9 = arith.constant dense<0.000000e+00> : vector<128xf32>
    %25 = vector.multi_reduction <add>, %24, %cst_9 [1] : vector<128x32xf32> to vector<128xf32>
    %26 = vector.shape_cast %25 : vector<128xf32> to vector<128x1xf32>
    %cst_10 = arith.constant 3.200000e+01 : f32
    %27 = vector.broadcast %cst_10 : f32 to vector<128x1xf32>
    %28 = arith.divf %26, %27 : vector<128x1xf32>
    %29 = vector.broadcast %28 : vector<128x1xf32> to vector<128x32xf32>
    %30 = arith.subf %24, %29 : vector<128x32xf32>
    %31 = arith.mulf %30, %30 : vector<128x32xf32>
    %cst_11 = arith.constant dense<0.000000e+00> : vector<128xf32>
    %32 = vector.multi_reduction <add>, %31, %cst_11 [1] : vector<128x32xf32> to vector<128xf32>
    %33 = vector.shape_cast %32 : vector<128xf32> to vector<128x1xf32>
    %cst_12 = arith.constant 3.200000e+01 : f32
    %34 = vector.broadcast %cst_12 : f32 to vector<128x1xf32>
    %35 = arith.divf %33, %34 : vector<128x1xf32>
    %36 = vector.broadcast %28 : vector<128x1xf32> to vector<128x32xf32>
    %37 = arith.subf %24, %36 : vector<128x32xf32>
    %cst_13 = arith.constant 9.99999974E-6 : f32
    %38 = vector.broadcast %cst_13 : f32 to vector<128x1xf32>
    %39 = arith.addf %35, %38 : vector<128x1xf32>
    %40 = math.rsqrt %39 : vector<128x1xf32>
    %41 = vector.broadcast %40 : vector<128x1xf32> to vector<128x32xf32>
    %42 = arith.mulf %37, %41 : vector<128x32xf32>
    %43 = arith.truncf %42 : vector<128x32xf32> to vector<128x32xbf16>
    %c0_14 = arith.constant 0 : index
    %c0_15 = arith.constant 0 : index
    %44 = vector.load %arg5[%c0_14, %c0_15] : memref<32x32xbf16, #tpu.memory_space<vmem>>, vector<32x32xbf16>
    %cst_16 = arith.constant dense<0.000000e+00> : vector<128x32xf32>
    %45 = tpu.matmul %43, %44, %cst_16 {dimension_numbers = #tpu.dot_dimension_numbers<[1], [0], [0], [1], [0, 0, 1, 1], [], []>} : vector<128x32xbf16>, vector<32x32xbf16>, vector<128x32xf32> -> vector<128x32xf32>
    %c0_17 = arith.constant 0 : index
    %c0_18 = arith.constant 0 : index
    %46 = vector.load %arg6[%c0_17, %c0_18] : memref<1x32xf32, #tpu.memory_space<vmem>>, vector<1x32xf32>
    %47 = vector.broadcast %46 : vector<1x32xf32> to vector<128x32xf32>
    %48 = arith.addf %45, %47 : vector<128x32xf32>
    %cst_19 = arith.constant 0.000000e+00 : f32
    %49 = vector.broadcast %cst_19 : f32 to vector<128x32xf32>
    %50 = arith.maximumf %48, %49 : vector<128x32xf32>
    %51 = arith.truncf %50 : vector<128x32xf32> to vector<128x32xbf16>
    %c0_20 = arith.constant 0 : index
    %c0_21 = arith.constant 0 : index
    %52 = vector.load %arg7[%c0_20, %c0_21] : memref<32x32xbf16, #tpu.memory_space<vmem>>, vector<32x32xbf16>
    %cst_22 = arith.constant dense<0.000000e+00> : vector<128x32xf32>
    %53 = tpu.matmul %51, %52, %cst_22 {dimension_numbers = #tpu.dot_dimension_numbers<[1], [0], [0], [1], [0, 0, 1, 1], [], []>} : vector<128x32xbf16>, vector<32x32xbf16>, vector<128x32xf32> -> vector<128x32xf32>
    %c0_23 = arith.constant 0 : index
    %c0_24 = arith.constant 0 : index
    %54 = vector.load %arg8[%c0_23, %c0_24] : memref<1x32xf32, #tpu.memory_space<vmem>>, vector<1x32xf32>
    %55 = vector.broadcast %54 : vector<1x32xf32> to vector<128x32xf32>
    %56 = arith.addf %53, %55 : vector<128x32xf32>
    %57 = arith.addf %56, %42 : vector<128x32xf32>
    %cst_25 = arith.constant dense<0.000000e+00> : vector<128xf32>
    %58 = vector.multi_reduction <add>, %57, %cst_25 [1] : vector<128x32xf32> to vector<128xf32>
    %59 = vector.shape_cast %58 : vector<128xf32> to vector<128x1xf32>
    %cst_26 = arith.constant 3.200000e+01 : f32
    %60 = vector.broadcast %cst_26 : f32 to vector<128x1xf32>
    %61 = arith.divf %59, %60 : vector<128x1xf32>
    %62 = vector.broadcast %61 : vector<128x1xf32> to vector<128x32xf32>
    %63 = arith.subf %57, %62 : vector<128x32xf32>
    %64 = arith.mulf %63, %63 : vector<128x32xf32>
    %cst_27 = arith.constant dense<0.000000e+00> : vector<128xf32>
    %65 = vector.multi_reduction <add>, %64, %cst_27 [1] : vector<128x32xf32> to vector<128xf32>
    %66 = vector.shape_cast %65 : vector<128xf32> to vector<128x1xf32>
    %cst_28 = arith.constant 3.200000e+01 : f32
    %67 = vector.broadcast %cst_28 : f32 to vector<128x1xf32>
    %68 = arith.divf %66, %67 : vector<128x1xf32>
    %69 = vector.broadcast %61 : vector<128x1xf32> to vector<128x32xf32>
    %70 = arith.subf %57, %69 : vector<128x32xf32>
    %cst_29 = arith.constant 9.99999974E-6 : f32
    %71 = vector.broadcast %cst_29 : f32 to vector<128x1xf32>
    %72 = arith.addf %68, %71 : vector<128x1xf32>
    %73 = math.rsqrt %72 : vector<128x1xf32>
    %74 = vector.broadcast %73 : vector<128x1xf32> to vector<128x32xf32>
    %75 = arith.mulf %70, %74 : vector<128x32xf32>
    %cst_30 = arith.constant 0.000000e+00 : f32
    %76 = vector.broadcast %cst_30 : f32 to vector<128x96xf32>
    %77 = tpu.concatenate %75, %76 in 1 : vector<128x32xf32>, vector<128x96xf32> -> vector<128x128xf32>
    %c0_31 = arith.constant 0 : index
    %c0_32 = arith.constant 0 : index
    %78 = vector.load %arg9[%c0_31, %c0_32] : memref<128x128xf32, #tpu.memory_space<vmem>>, vector<128x128xf32>
    tpu.vector_store %arg9[%c0_31, %c0_32], %77 {strides = array<i32>} : memref<128x128xf32, #tpu.memory_space<vmem>>, vector<128x128xf32>,
    return
  }
  func.func @transform_0(%arg0: i32) -> (i32, i32) {
    %c0_i32 = arith.constant 0 : i32
    %c0_i32_0 = arith.constant 0 : i32
    return %arg0, %c0_i32 : i32, i32
  }
  func.func @transform_1(%arg0: i32) -> (i32, i32) {
    %c0_i32 = arith.constant 0 : i32
    %c0_i32_0 = arith.constant 0 : i32
    %c0_i32_1 = arith.constant 0 : i32
    return %c0_i32, %c0_i32_0 : i32, i32
  }
  func.func @transform_2(%arg0: i32) -> (i32, i32) {
    %c0_i32 = arith.constant 0 : i32
    %c0_i32_0 = arith.constant 0 : i32
    return %arg0, %c0_i32 : i32, i32
  }
  func.func @transform_3(%arg0: i32) -> (i32, i32) {
    %c0_i32 = arith.constant 0 : i32
    %c0_i32_0 = arith.constant 0 : i32
    %c0_i32_1 = arith.constant 0 : i32
    return %c0_i32, %c0_i32_0 : i32, i32
  }
  func.func @transform_4(%arg0: i32) -> (i32, i32) {
    %c0_i32 = arith.constant 0 : i32
    %c0_i32_0 = arith.constant 0 : i32
    %c0_i32_1 = arith.constant 0 : i32
    return %c0_i32, %c0_i32_0 : i32, i32
  }
  func.func @transform_5(%arg0: i32) -> (i32, i32) {
    %c0_i32 = arith.constant 0 : i32
    %c0_i32_0 = arith.constant 0 : i32
    %c0_i32_1 = arith.constant 0 : i32
    return %c0_i32, %c0_i32_0 : i32, i32
  }
  func.func @transform_6(%arg0: i32) -> (i32, i32) {
    %c0_i32 = arith.constant 0 : i32
    %c0_i32_0 = arith.constant 0 : i32
    %c0_i32_1 = arith.constant 0 : i32
    return %c0_i32, %c0_i32_0 : i32, i32
  }
  func.func @transform_7(%arg0: i32) -> (i32, i32) {
    %c0_i32 = arith.constant 0 : i32
    %c0_i32_0 = arith.constant 0 : i32
    %c0_i32_1 = arith.constant 0 : i32
    return %c0_i32, %c0_i32_0 : i32, i32
  }
  func.func @transform_8(%arg0: i32) -> (i32, i32) {
    %c0_i32 = arith.constant 0 : i32
    %c0_i32_0 = arith.constant 0 : i32
    return %arg0, %c0_i32 : i32, i32
  }
}

</mosaic_0001>

<llo_original>
// kernel: gated_block.2
$region0: #{gated_block.2}
  #allocation0 [shape = 'u32[]', space=smem, size = 0x4, offset = 0x4, fixed_abs, tag = 'smem constant byte address 0x4 - core index']
  #allocation1 [shape = 'u32[72,128]{1,0:T(1,128)}', space=vmem, size = 0x9000, scoped, tag = 'internal scratch']
  %s0 = inlined_call_operand.vmem [shape: bf16[256,32], index: 0, kind: input, shape index: {}]
  %s1 = inlined_call_operand.vmem [shape: bf16[256,8], index: 1, kind: input, shape index: {}]
  %s2 = inlined_call_operand.vmem [shape: bf16[32,128], index: 2, kind: input, shape index: {}]
  %s3 = inlined_call_operand.vmem [shape: bf16[8,128], index: 3, kind: input, shape index: {}]
  %s4 = inlined_call_operand.vmem [shape: bf16[256,256], index: 4, kind: output, shape index: {}]
  %s5 = sld [smem:[#allocation0]]
  $region49: #{gated_block.2} parent=0
    _
  %s7 = ssub.s32 1, %s5
  %s8 = scalar_select 0, %s7, %s5
  loop: start=0, step=1, limit=4
  $region2: #{gated_block.2} parent=0 // loop_pre_header
    _
  $region3: #{gated_block.2} parent=0 // loop_header
    %s10 = sphi 0, %s14
    %p11 = scmp.ge.s32.totalorder %s10, 4
    %s20 = sphi 0, %s22
    %s23 = sphi 0, %s20
    %s24 = sphi 0, %s23
    %s40 = sphi 0, %s24
    %s46 = sphi 0, %s48
    %s49 = sphi 0, %s46
    %s50 = sphi 0, %s49
    %s66 = sphi 0, %s50
    %s70 = sphi 0, %s70
    %s72 = sphi 0, %s70
    %s73 = sphi 0, %s72
    %s87 = sphi 0, %s73
    %s91 = sphi 0, %s91
    %s93 = sphi 0, %s91
    %s94 = sphi 0, %s93
    %s108 = sphi 0, %s94
    %s114 = sphi 0, %s116
    %s117 = sphi 0, %s114
    %s118 = sphi 0, %s117
    %s134 = sphi 0, %s118
  $region4: #{gated_block.2} parent=0 // loop_header_branch
    %13 = sbr.rel (%p11) target = $region8
  $region5: #{gated_block.2} parent=0 // loop_body
    %s15 = ssub.s32 %s10, 1
    %s16 = ssub.s32 %s10, 2
    %s17 = sadd.s32 %s10, 1
    %s18 = ssub.s32 %s10, %s17
    %p19 = scmp.eq.s32.totalorder %s18, 0
    %s21 = sadd.s32 %s20, 1
    %s22 = scalar_select %p19, %s20, %s21
    %p25 = pneg %p19
    %p26 = scmp.eq.s32.totalorder %s10, 1
    %p27 = por %p25, %p26
    %p28 = scmp.ne.s32.totalorder %s20, %s23
    %p29 = scmp.eq.s32.totalorder %s10, 0
    %p30 = por %p28, %p29
    %p31 = scmp.ne.s32.totalorder %s20, %s23
    %p32 = scmp.eq.s32.totalorder %s15, 1
    %p33 = por %p31, %p32
    %p34 = scmp.ne.s32.totalorder %s23, %s24
    %p35 = scmp.eq.s32.totalorder %s15, 0
    %p36 = por %p34, %p35
    %p37 = scmp.ne.s32.totalorder %s23, %s24
    %p38 = scmp.eq.s32.totalorder %s16, 1
    %p39 = por %p37, %p38
    %p41 = scmp.ne.s32.totalorder %s24, %s40
    %p42 = scmp.eq.s32.totalorder %s16, 0
    %p43 = por %p41, %p42
    %s44 = ssub.s32 %s10, %s17
    %p45 = scmp.eq.s32.totalorder %s44, 0
    %s47 = sadd.s32 %s46, 1
    %s48 = scalar_select %p45, %s46, %s47
    %p51 = pneg %p45
    %p52 = scmp.eq.s32.totalorder %s10, 1
    %p53 = por %p51, %p52
    %p54 = scmp.ne.s32.totalorder %s46, %s49
    %p55 = scmp.eq.s32.totalorder %s10, 0
    %p56 = por %p54, %p55
    %p57 = scmp.ne.s32.totalorder %s46, %s49
    %p58 = scmp.eq.s32.totalorder %s15, 1
    %p59 = por %p57, %p58
    %p60 = scmp.ne.s32.totalorder %s49, %s50
    %p61 = scmp.eq.s32.totalorder %s15, 0
    %p62 = por %p60, %p61
    %p63 = scmp.ne.s32.totalorder %s49, %s50
    %p64 = scmp.eq.s32.totalorder %s16, 1
    %p65 = por %p63, %p64
    %p67 = scmp.ne.s32.totalorder %s50, %s66
    %p68 = scmp.eq.s32.totalorder %s16, 0
    %p69 = por %p67, %p68
    %s71 = sadd.s32 %s70, 1
    %p74 = scmp.eq.s32.totalorder %s10, 1
    %p75 = scmp.ne.s32.totalorder %s70, %s72
    %p76 = scmp.eq.s32.totalorder %s10, 0
    %p77 = por %p75, %p76
    %p78 = scmp.ne.s32.totalorder %s70, %s72
    %p79 = scmp.eq.s32.totalorder %s15, 1
    %p80 = por %p78, %p79
    %p81 = scmp.ne.s32.totalorder %s72, %s73
    %p82 = scmp.eq.s32.totalorder %s15, 0
    %p83 = por %p81, %p82
    %p84 = scmp.ne.s32.totalorder %s72, %s73
    %p85 = scmp.eq.s32.totalorder %s16, 1
    %p86 = por %p84, %p85
    %p88 = scmp.ne.s32.totalorder %s73, %s87
    %p89 = scmp.eq.s32.totalorder %s16, 0
    %p90 = por %p88, %p89
    %s92 = sadd.s32 %s91, 1
    %p95 = scmp.eq.s32.totalorder %s10, 1
    %p96 = scmp.ne.s32.totalorder %s91, %s93
    %p97 = scmp.eq.s32.totalorder %s10, 0
    %p98 = por %p96, %p97
    %p99 = scmp.ne.s32.totalorder %s91, %s93
    %p100 = scmp.eq.s32.totalorder %s15, 1
    %p101 = por %p99, %p100
    %p102 = scmp.ne.s32.totalorder %s93, %s94
    %p103 = scmp.eq.s32.totalorder %s15, 0
    %p104 = por %p102, %p103
    %p105 = scmp.ne.s32.totalorder %s93, %s94
    %p106 = scmp.eq.s32.totalorder %s16, 1
    %p107 = por %p105, %p106
    %p109 = scmp.ne.s32.totalorder %s94, %s108
    %p110 = scmp.eq.s32.totalorder %s16, 0
    %p111 = por %p109, %p110
    %s112 = ssub.s32 %s10, %s17
    %p113 = scmp.eq.s32.totalorder %s112, 0
    %s115 = sadd.s32 %s114, 1
    %s116 = scalar_select %p113, %s114, %s115
    %p119 = pneg %p113
    %p120 = scmp.eq.s32.totalorder %s10, 1
    %p121 = por %p119, %p120
    %p122 = scmp.ne.s32.totalorder %s114, %s117
    %p123 = scmp.eq.s32.totalorder %s10, 0
    %p124 = por %p122, %p123
    %p125 = scmp.ne.s32.totalorder %s114, %s117
    %p126 = scmp.eq.s32.totalorder %s15, 1
    %p127 = por %p125, %p126
    %p128 = scmp.ne.s32.totalorder %s117, %s118
    %p129 = scmp.eq.s32.totalorder %s15, 0
    %p130 = por %p128, %p129
    %p131 = scmp.ne.s32.totalorder %s117, %s118
    %p132 = scmp.eq.s32.totalorder %s16, 1
    %p133 = por %p131, %p132
    %p135 = scmp.ne.s32.totalorder %s118, %s134
    %p136 = scmp.eq.s32.totalorder %s16, 0
    %p137 = por %p135, %p136
    %p138 = scmp.le.s32.totalorder 1, %s10
    %p139 = scmp.lt.s32.totalorder %s10, 3
    %p140 = pnand %p138, %p139
    %p141 = pneg %p140
    // Predicated region
    $region9: #{gated_block.2} parent=5 // pred_check
      _
    $region10: #{gated_block.2} parent=5 // pred_check_branch
      %143 = sbr.rel (%p140) target = $region12
    $region11: #{gated_block.2} parent=5 // pred_region
      %s144 = ssub.s32 %s10, 1
      // Predicated region
      $region13: #{gated_block.2} parent=11 // pred_check
        %p145 = pneg %p83
      $region14: #{gated_block.2} parent=11 // pred_check_branch
        %147 = sbr.rel (%p145) target = $region16
      $region15: #{gated_block.2} parent=11 // pred_region
        _
      $region16: #{gated_block.2} parent=11 // pred_fallthru
        _
      // Predicated region
      $region17: #{gated_block.2} parent=11 // pred_check
        %p148 = pneg %p104
      $region18: #{gated_block.2} parent=11 // pred_check_branch
        %150 = sbr.rel (%p148) target = $region20
      $region19: #{gated_block.2} parent=11 // pred_region
        _
      $region20: #{gated_block.2} parent=11 // pred_fallthru
        _
    $region12: #{gated_block.2} parent=5 // pred_fallthru
      _
    %p151 = scmp.lt.s32.totalorder %s10, 2
    // Predicated region
    $region21: #{gated_block.2} parent=5 // pred_check
      %p152 = pneg %p151
    $region22: #{gated_block.2} parent=5 // pred_check_branch
      %154 = sbr.rel (%p152) target = $region24
    $region23: #{gated_block.2} parent=5 // pred_region
      // Predicated region
      $region25: #{gated_block.2} parent=23 // pred_check
        %p155 = pneg %p30
      $region26: #{gated_block.2} parent=23 // pred_check_branch
        %157 = sbr.rel (%p155) target = $region28
      $region27: #{gated_block.2} parent=23 // pred_region
        %s158 = smul.u32 16, %s10
        %p159 = scmp.lt.s32.totalorder %s158, 31
        %s160 = scalar_select %p159, %s158, 31
        %s161 = smul.addr %s160, 4
        %s162 = scalar_lea.vmem %s0, %s161
        %s163 = smul.u32 16, %s10
      $region28: #{gated_block.2} parent=23 // pred_fallthru
        _
      // Predicated region
      $region29: #{gated_block.2} parent=23 // pred_check
        %p164 = pneg %p56
      $region30: #{gated_block.2} parent=23 // pred_check_branch
        %166 = sbr.rel (%p164) target = $region32
      $region31: #{gated_block.2} parent=23 // pred_region
        %s167 = smul.u32 16, %s10
        %p168 = scmp.lt.s32.totalorder %s167, 31
        %s169 = scalar_select %p168, %s167, 31
        %s170 = smul.addr %s169, 4
        %s171 = scalar_lea.vmem %s1, %s170
        %s172 = smul.u32 16, %s10
      $region32: #{gated_block.2} parent=23 // pred_fallthru
        _
    $region24: #{gated_block.2} parent=5 // pred_fallthru
      _
    %p173 = scmp.le.s32.totalorder 1, %s10
    %p174 = scmp.lt.s32.totalorder %s10, 3
    %p175 = pnand %p173, %p174
    %p176 = pneg %p175
    // Predicated region
    $region33: #{gated_block.2} parent=5 // pred_check
      _
    $region34: #{gated_block.2} parent=5 // pred_check_branch
      %178 = sbr.rel (%p175) target = $region36
    $region35: #{gated_block.2} parent=5 // pred_region
      %s179 = ssub.s32 %s10, 1
      %s180 = smul.u32 16, %s15
      %p181 = scmp.lt.s32.totalorder %s180, 31
      %s182 = scalar_select %p181, %s180, 31
      %s183 = smul.addr %s182, 4
      %s184 = scalar_lea.vmem %s0, %s183
      %p185 = pneg %p36
      %p186 = pneg %p33
      %s187 = smul.u32 16, %s15
      %p188 = scmp.lt.s32.totalorder %s187, 31
      %s189 = scalar_select %p188, %s187, 31
      %s190 = smul.addr %s189, 4
      %s191 = scalar_lea.vmem %s1, %s190
      %p192 = pneg %p62
      %p193 = pneg %p59
      %p194 = pneg %p83
      %p195 = pneg %p80
      %p196 = pneg %p104
      %p197 = pneg %p101
      %p198 = pneg %p130
      %p199 = pneg %p127
      %s200 = smul.u32 16, %s15
      %p201 = scmp.lt.s32.totalorder %s200, 31
      %s202 = scalar_select %p201, %s200, 31
      %s203 = smul.addr %s202, 2
      %s204 = smul.addr %s203, 4
      %s205 = scalar_lea.vmem %s4, %s204
      %s206 = smul.u32 16, %s15
      %p207 = scmp.lt.s32.totalorder %s206, 31
      %s208 = scalar_select %p207, %s206, 31
      %s209 = smul.addr %s208, 4
      %s210 = scalar_lea.vmem %s0, %s209
      %s211 = smul.u32 16, %s15
      %s212 = smul.u32 16, %s15
      %p213 = scmp.lt.s32.totalorder %s212, 31
      %s214 = scalar_select %p213, %s212, 31
      %s215 = smul.addr %s214, 4
      %s216 = scalar_lea.vmem %s1, %s215
      %s217 = smul.u32 16, %s15
      %s218 = smul.u32 16, %s15
      %p219 = scmp.lt.s32.totalorder %s218, 31
      %s220 = scalar_select %p219, %s218, 31
      %s221 = smul.addr %s220, 2
      %s222 = smul.addr %s221, 4
      %s223 = scalar_lea.vmem %s4, %s222
      %s224 = smul.u32 16, %s15
      %v226 = vld [vmem:[%s210] sm:$0xf]
      %v227 = vld [vmem:[%s210 + $0x4] sm:$0xf]
      %v228 = vld [vmem:[%s210 + $0x8] sm:$0xf]
      %v229 = vld [vmem:[%s210 + $0xc] sm:$0xf]
      %v230 = vld [vmem:[%s210 + $0x10] sm:$0xf]
      %v231 = vld [vmem:[%s210 + $0x14] sm:$0xf]
      %v232 = vld [vmem:[%s210 + $0x18] sm:$0xf]
      %v233 = vld [vmem:[%s210 + $0x1c] sm:$0xf]
      %v234 = vld [vmem:[%s210 + $0x20] sm:$0xf]
      %v235 = vld [vmem:[%s210 + $0x24] sm:$0xf]
      %v236 = vld [vmem:[%s210 + $0x28] sm:$0xf]
      %v237 = vld [vmem:[%s210 + $0x2c] sm:$0xf]
      %v238 = vld [vmem:[%s210 + $0x30] sm:$0xf]
      %v239 = vld [vmem:[%s210 + $0x34] sm:$0xf]
      %v240 = vld [vmem:[%s210 + $0x38] sm:$0xf]
      %v241 = vld [vmem:[%s210 + $0x3c] sm:$0xf]
      %v242 = vld [vmem:[%s2] sm:$0xf]
      %v243 = vld [vmem:[%s2 + $0x4] sm:$0xf]
      %v244 = vld [vmem:[%s2 + $0x8] sm:$0xf]
      %v245 = vld [vmem:[%s2 + $0xc] sm:$0xf]
      %v262 = vunpack.c.l.b16 %v226
      %v263 = vunpack.c.l.b16 %v227
      %v264 = vunpack.c.l.b16 %v228
      %v265 = vunpack.c.l.b16 %v229
      %v266 = vunpack.c.l.b16 %v230
      %v267 = vunpack.c.l.b16 %v231
      %v268 = vunpack.c.l.b16 %v232
      %v269 = vunpack.c.l.b16 %v233
      %v270 = vunpack.c.l.b16 %v234
      %v271 = vunpack.c.l.b16 %v235
      %v272 = vunpack.c.l.b16 %v236
      %v273 = vunpack.c.l.b16 %v237
      %v274 = vunpack.c.l.b16 %v238
      %v275 = vunpack.c.l.b16 %v239
      %v276 = vunpack.c.l.b16 %v240
      %v277 = vunpack.c.l.b16 %v241
      %v278 = vpack.c.b16 %v263, %v262
      %v279 = vpack.c.b16 %v265, %v264
      %v280 = vpack.c.b16 %v267, %v266
      %v281 = vpack.c.b16 %v269, %v268
      %v282 = vpack.c.b16 %v271, %v270
      %v283 = vpack.c.b16 %v273, %v272
      %v284 = vpack.c.b16 %v275, %v274
      %v285 = vpack.c.b16 %v277, %v276
      %v290 = vunpack.c.l.b16 %v242
      %v291 = vunpack.c.l.b16 %v243
      %v292 = vunpack.c.l.b16 %v244
      %v293 = vunpack.c.l.b16 %v245
      %v294 = vpack.c.b16 %v291, %v290
      %v295 = vpack.c.b16 %v293, %v292
      %vm298 = vcmask 261120
      %v300 = vsel %vm298, %v278, 0
      %v303 = vsel %vm298, %v279, 0
      %v306 = vsel %vm298, %v280, 0
      %v309 = vsel %vm298, %v281, 0
      %v312 = vsel %vm298, %v282, 0
      %v315 = vsel %vm298, %v283, 0
      %v318 = vsel %vm298, %v284, 0
      %v321 = vsel %vm298, %v285, 0
      %323 = vmatpush.bf16.msra.mxu0 0
      %324 = vmatpush.bf16.msra.mxu0 0
      %325 = vmatpush.bf16.msra.mxu0 0
      %326 = vmatpush.bf16.msra.mxu0 0
      %327 = vmatpush.bf16.msra.mxu0 0
      %328 = vmatpush.bf16.msra.mxu0 0
      %329 = vmatpush.bf16.msra.mxu0 %v295
      %330 = vmatpush.bf16.msra.mxu0 %v294
      %331 = vmatmul.bf16.gmra.mxu0 %v300
      %v332 = vpop.f32.mrf.mxu0
      %v333 = vadd.f32 0.0, %v332
      %v334 = vpop.f32.mrf.mxu0
      %v335 = vadd.f32 0.0, %v334
      %336 = vmatmul.bf16.gmra.mxu0 %v303
      %v337 = vpop.f32.mrf.mxu0
      %v338 = vadd.f32 0.0, %v337
      %v339 = vpop.f32.mrf.mxu0
      %v340 = vadd.f32 0.0, %v339
      %341 = vmatmul.bf16.gmra.mxu0 %v306
      %v342 = vpop.f32.mrf.mxu0
      %v343 = vadd.f32 0.0, %v342
      %v344 = vpop.f32.mrf.mxu0
      %v345 = vadd.f32 0.0, %v344
      %346 = vmatmul.bf16.gmra.mxu0 %v309
      %v347 = vpop.f32.mrf.mxu0
      %v348 = vadd.f32 0.0, %v347
      %v349 = vpop.f32.mrf.mxu0
      %v350 = vadd.f32 0.0, %v349
      %351 = vmatmul.bf16.gmra.mxu0 %v312
      %v352 = vpop.f32.mrf.mxu0
      %v353 = vadd.f32 0.0, %v352
      %v354 = vpop.f32.mrf.mxu0
      %v355 = vadd.f32 0.0, %v354
      %356 = vmatmul.bf16.gmra.mxu0 %v315
      %v357 = vpop.f32.mrf.mxu0
      %v358 = vadd.f32 0.0, %v357
      %v359 = vpop.f32.mrf.mxu0
      %v360 = vadd.f32 0.0, %v359
      %361 = vmatmul.bf16.gmra.mxu0 %v318
      %v362 = vpop.f32.mrf.mxu0
      %v363 = vadd.f32 0.0, %v362
      %v364 = vpop.f32.mrf.mxu0
      %v365 = vadd.f32 0.0, %v364
      %366 = vmatmul.bf16.gmra.mxu0 %v321
      %v367 = vpop.f32.mrf.mxu0
      %v368 = vadd.f32 0.0, %v367
      %v369 = vpop.f32.mrf.mxu0
      %v370 = vadd.f32 0.0, %v369
      %371 = vdwg.mxu0
      %v372 = vld [vmem:[%s216] sm:$0xf]
      %v373 = vld [vmem:[%s216 + $0x4] sm:$0xf]
      %v374 = vld [vmem:[%s216 + $0x8] sm:$0xf]
      %v375 = vld [vmem:[%s216 + $0xc] sm:$0xf]
      %v376 = vld [vmem:[%s216 + $0x10] sm:$0xf]
      %v377 = vld [vmem:[%s216 + $0x14] sm:$0xf]
      %v378 = vld [vmem:[%s216 + $0x18] sm:$0xf]
      %v379 = vld [vmem:[%s216 + $0x1c] sm:$0xf]
      %v380 = vld [vmem:[%s216 + $0x20] sm:$0xf]
      %v381 = vld [vmem:[%s216 + $0x24] sm:$0xf]
      %v382 = vld [vmem:[%s216 + $0x28] sm:$0xf]
      %v383 = vld [vmem:[%s216 + $0x2c] sm:$0xf]
      %v384 = vld [vmem:[%s216 + $0x30] sm:$0xf]
      %v385 = vld [vmem:[%s216 + $0x34] sm:$0xf]
      %v386 = vld [vmem:[%s216 + $0x38] sm:$0xf]
      %v387 = vld [vmem:[%s216 + $0x3c] sm:$0xf]
      %v388 = vld [vmem:[%s3] sm:$0xf]
      %v405 = vunpack.c.l.b16 %v372
      %v406 = vunpack.c.l.b16 %v373
      %v407 = vunpack.c.l.b16 %v374
      %v408 = vunpack.c.l.b16 %v375
      %v409 = vunpack.c.l.b16 %v376
      %v410 = vunpack.c.l.b16 %v377
      %v411 = vunpack.c.l.b16 %v378
      %v412 = vunpack.c.l.b16 %v379
      %v413 = vunpack.c.l.b16 %v380
      %v414 = vunpack.c.l.b16 %v381
      %v415 = vunpack.c.l.b16 %v382
      %v416 = vunpack.c.l.b16 %v383
      %v417 = vunpack.c.l.b16 %v384
      %v418 = vunpack.c.l.b16 %v385
      %v419 = vunpack.c.l.b16 %v386
      %v420 = vunpack.c.l.b16 %v387
      %v421 = vpack.c.b16 %v406, %v405
      %v422 = vpack.c.b16 %v408, %v407
      %v423 = vpack.c.b16 %v410, %v409
      %v424 = vpack.c.b16 %v412, %v411
      %v425 = vpack.c.b16 %v414, %v413
      %v426 = vpack.c.b16 %v416, %v415
      %v427 = vpack.c.b16 %v418, %v417
      %v428 = vpack.c.b16 %v420, %v419
      %vm429 = vcmask 64512
      %v431 = vsel %vm429, %v421, 0
      %v434 = vsel %vm429, %v422, 0
      %v437 = vsel %vm429, %v423, 0
      %v440 = vsel %vm429, %v424, 0
      %v443 = vsel %vm429, %v425, 0
      %v446 = vsel %vm429, %v426, 0
      %v449 = vsel %vm429, %v427, 0
      %v452 = vsel %vm429, %v428, 0
      %vm454 = vcmask 1043456
      %v456 = vsel %vm454, %v388, 0
      %458 = vmatpush.bf16.msra.mxu0 0
      %459 = vmatpush.bf16.msra.mxu0 0
      %460 = vmatpush.bf16.msra.mxu0 0
      %461 = vmatpush.bf16.msra.mxu0 0
      %462 = vmatpush.bf16.msra.mxu0 0
      %463 = vmatpush.bf16.msra.mxu0 0
      %464 = vmatpush.bf16.msra.mxu0 0
      %465 = vmatpush.bf16.msra.mxu0 %v456
      %466 = vmatmul.bf16.gmra.mxu0 %v431
      %v467 = vpop.f32.mrf.mxu0
      %v468 = vadd.f32 0.0, %v467
      %v469 = vpop.f32.mrf.mxu0
      %v470 = vadd.f32 0.0, %v469
      %471 = vmatmul.bf16.gmra.mxu0 %v434
      %v472 = vpop.f32.mrf.mxu0
      %v473 = vadd.f32 0.0, %v472
      %v474 = vpop.f32.mrf.mxu0
      %v475 = vadd.f32 0.0, %v474
      %476 = vmatmul.bf16.gmra.mxu0 %v437
      %v477 = vpop.f32.mrf.mxu0
      %v478 = vadd.f32 0.0, %v477
      %v479 = vpop.f32.mrf.mxu0
      %v480 = vadd.f32 0.0, %v479
      %481 = vmatmul.bf16.gmra.mxu0 %v440
      %v482 = vpop.f32.mrf.mxu0
      %v483 = vadd.f32 0.0, %v482
      %v484 = vpop.f32.mrf.mxu0
      %v485 = vadd.f32 0.0, %v484
      %486 = vmatmul.bf16.gmra.mxu0 %v443
      %v487 = vpop.f32.mrf.mxu0
      %v488 = vadd.f32 0.0, %v487
      %v489 = vpop.f32.mrf.mxu0
      %v490 = vadd.f32 0.0, %v489
      %491 = vmatmul.bf16.gmra.mxu0 %v446
      %v492 = vpop.f32.mrf.mxu0
      %v493 = vadd.f32 0.0, %v492
      %v494 = vpop.f32.mrf.mxu0
      %v495 = vadd.f32 0.0, %v494
      %496 = vmatmul.bf16.gmra.mxu0 %v449
      %v497 = vpop.f32.mrf.mxu0
      %v498 = vadd.f32 0.0, %v497
      %v499 = vpop.f32.mrf.mxu0
      %v500 = vadd.f32 0.0, %v499
      %501 = vmatmul.bf16.gmra.mxu0 %v452
      %v502 = vpop.f32.mrf.mxu0
      %v503 = vadd.f32 0.0, %v502
      %v504 = vpop.f32.mrf.mxu0
      %v505 = vadd.f32 0.0, %v504
      %506 = vdwg.mxu0
      %v507 = vpack.c.bf16 %v468, %v333
      %v508 = vpack.c.bf16 %v470, %v335
      %v509 = vpack.c.bf16 %v473, %v338
      %v510 = vpack.c.bf16 %v475, %v340
      %v511 = vpack.c.bf16 %v478, %v343
      %v512 = vpack.c.bf16 %v480, %v345
      %v513 = vpack.c.bf16 %v483, %v348
      %v514 = vpack.c.bf16 %v485, %v350
      %v515 = vpack.c.bf16 %v488, %v353
      %v516 = vpack.c.bf16 %v490, %v355
      %v517 = vpack.c.bf16 %v493, %v358
      %v518 = vpack.c.bf16 %v495, %v360
      %v519 = vpack.c.bf16 %v498, %v363
      %v520 = vpack.c.bf16 %v500, %v365
      %v521 = vpack.c.bf16 %v503, %v368
      %v522 = vpack.c.bf16 %v505, %v370
      %523 = vst [vmem:[%s223] sm:$0xff] %v507
      %524 = vst [vmem:[%s223 + $0x8] sm:$0xff] %v508
      %525 = vst [vmem:[%s223 + $0x10] sm:$0xff] %v509
      %526 = vst [vmem:[%s223 + $0x18] sm:$0xff] %v510
      %527 = vst [vmem:[%s223 + $0x20] sm:$0xff] %v511
      %528 = vst [vmem:[%s223 + $0x28] sm:$0xff] %v512
      %529 = vst [vmem:[%s223 + $0x30] sm:$0xff] %v513
      %530 = vst [vmem:[%s223 + $0x38] sm:$0xff] %v514
      %531 = vst [vmem:[%s223 + $0x40] sm:$0xff] %v515
      %532 = vst [vmem:[%s223 + $0x48] sm:$0xff] %v516
      %533 = vst [vmem:[%s223 + $0x50] sm:$0xff] %v517
      %534 = vst [vmem:[%s223 + $0x58] sm:$0xff] %v518
      %535 = vst [vmem:[%s223 + $0x60] sm:$0xff] %v519
      %536 = vst [vmem:[%s223 + $0x68] sm:$0xff] %v520
      %537 = vst [vmem:[%s223 + $0x70] sm:$0xff] %v521
      %538 = vst [vmem:[%s223 + $0x78] sm:$0xff] %v522
      %s539 = smul.u32 16, %s15
      %p540 = scmp.lt.s32.totalorder %s539, 31
      %s541 = scalar_select %p540, %s539, 31
      %s542 = smul.addr %s541, 2
      %s543 = smul.addr %s542, 4
      %s544 = scalar_lea.vmem %s4, %s543
      // Predicated region
      $region37: #{gated_block.2} parent=35 // pred_check
        %p545 = pneg %p127
      $region38: #{gated_block.2} parent=35 // pred_check_branch
        %547 = sbr.rel (%p545) target = $region40
      $region39: #{gated_block.2} parent=35 // pred_region
        %s548 = smul.u32 16, %s15
      $region40: #{gated_block.2} parent=35 // pred_fallthru
        _
    $region36: #{gated_block.2} parent=5 // pred_fallthru
      _
    %p549 = scmp.le.s32.totalorder 2, %s10
    // Predicated region
    $region41: #{gated_block.2} parent=5 // pred_check
      %p550 = pneg %p549
    $region42: #{gated_block.2} parent=5 // pred_check_branch
      %552 = sbr.rel (%p550) target = $region44
    $region43: #{gated_block.2} parent=5 // pred_region
      %s553 = ssub.s32 %s10, 2
      // Predicated region
      $region45: #{gated_block.2} parent=43 // pred_check
        %p554 = pneg %p133
      $region46: #{gated_block.2} parent=43 // pred_check_branch
        %556 = sbr.rel (%p554) target = $region48
      $region47: #{gated_block.2} parent=43 // pred_region
        %s557 = smul.u32 16, %s16
        %p558 = scmp.lt.s32.totalorder %s557, 31
        %s559 = scalar_select %p558, %s557, 31
        %s560 = smul.addr %s559, 2
        %s561 = smul.addr %s560, 4
        %s562 = scalar_lea.vmem %s4, %s561
      $region48: #{gated_block.2} parent=43 // pred_fallthru
        _
    $region44: #{gated_block.2} parent=5 // pred_fallthru
      _
  $region6: #{gated_block.2} parent=0 // loop_footer
    %s14 = sadd.s32 1, %s10
  $region7: #{gated_block.2} parent=0 // loop_footer_branch
    %9 = sbr.rel target = $region3
  $region8: #{gated_block.2} parent=0 // loop_exit
    _

// kernel: gated_block.3
$region0: #{gated_block.3}
  #allocation0 [shape = 'u32[]', space=smem, size = 0x4, offset = 0x4, fixed_abs, tag = 'smem constant byte address 0x4 - core index']
  #allocation1 [shape = 'u32[72,128]{1,0:T(1,128)}', space=vmem, size = 0x9000, scoped, tag = 'internal scratch']
  %s0 = inlined_call_operand.vmem [shape: bf16[256,256], index: 0, kind: input, shape index: {}]
  %s1 = inlined_call_operand.vmem [shape: bf16[256,256], index: 1, kind: input, shape index: {}]
  %s2 = inlined_call_operand.vmem [shape: f32[256,32], index: 2, kind: input, shape index: {}]
  %s3 = inlined_call_operand.vmem [shape: f32[1,256], index: 3, kind: input, shape index: {}]
  %s4 = inlined_call_operand.vmem [shape: bf16[32,32], index: 4, kind: input, shape index: {}]
  %s5 = inlined_call_operand.vmem [shape: f32[1,32], index: 5, kind: input, shape index: {}]
  %s6 = inlined_call_operand.vmem [shape: bf16[32,32], index: 6, kind: input, shape index: {}]
  %s7 = inlined_call_operand.vmem [shape: f32[1,32], index: 7, kind: input, shape index: {}]
  %s8 = inlined_call_operand.vmem [shape: f32[256,128], index: 8, kind: output, shape index: {}]
  %s9 = sld [smem:[#allocation0]]
  $region65: #{gated_block.3} parent=0
    _
  %s11 = ssub.s32 1, %s9
  %s12 = scalar_select 0, %s11, %s9
  loop: start=0, step=1, limit=4
  $region2: #{gated_block.3} parent=0 // loop_pre_header
    _
  $region3: #{gated_block.3} parent=0 // loop_header
    %s14 = sphi 0, %s18
    %p15 = scmp.ge.s32.totalorder %s14, 4
    %s24 = sphi 0, %s26
    %s27 = sphi 0, %s24
    %s28 = sphi 0, %s27
    %s44 = sphi 0, %s28
    %s48 = sphi 0, %s48
    %s50 = sphi 0, %s48
    %s51 = sphi 0, %s50
    %s65 = sphi 0, %s51
    %s71 = sphi 0, %s73
    %s74 = sphi 0, %s71
    %s75 = sphi 0, %s74
    %s91 = sphi 0, %s75
    %s95 = sphi 0, %s95
    %s97 = sphi 0, %s95
    %s98 = sphi 0, %s97
    %s112 = sphi 0, %s98
    %s116 = sphi 0, %s116
    %s118 = sphi 0, %s116
    %s119 = sphi 0, %s118
    %s133 = sphi 0, %s119
    %s137 = sphi 0, %s137
    %s139 = sphi 0, %s137
    %s140 = sphi 0, %s139
    %s154 = sphi 0, %s140
    %s158 = sphi 0, %s158
    %s160 = sphi 0, %s158
    %s161 = sphi 0, %s160
    %s175 = sphi 0, %s161
    %s179 = sphi 0, %s179
    %s181 = sphi 0, %s179
    %s182 = sphi 0, %s181
    %s196 = sphi 0, %s182
    %s202 = sphi 0, %s204
    %s205 = sphi 0, %s202
    %s206 = sphi 0, %s205
    %s222 = sphi 0, %s206
  $region4: #{gated_block.3} parent=0 // loop_header_branch
    %17 = sbr.rel (%p15) target = $region8
  $region5: #{gated_block.3} parent=0 // loop_body
    %s19 = ssub.s32 %s14, 1
    %s20 = ssub.s32 %s14, 2
    %s21 = sadd.s32 %s14, 1
    %s22 = ssub.s32 %s14, %s21
    %p23 = scmp.eq.s32.totalorder %s22, 0
    %s25 = sadd.s32 %s24, 1
    %s26 = scalar_select %p23, %s24, %s25
    %p29 = pneg %p23
    %p30 = scmp.eq.s32.totalorder %s14, 1
    %p31 = por %p29, %p30
    %p32 = scmp.ne.s32.totalorder %s24, %s27
    %p33 = scmp.eq.s32.totalorder %s14, 0
    %p34 = por %p32, %p33
    %p35 = scmp.ne.s32.totalorder %s24, %s27
    %p36 = scmp.eq.s32.totalorder %s19, 1
    %p37 = por %p35, %p36
    %p38 = scmp.ne.s32.totalorder %s27, %s28
    %p39 = scmp.eq.s32.totalorder %s19, 0
    %p40 = por %p38, %p39
    %p41 = scmp.ne.s32.totalorder %s27, %s28
    %p42 = scmp.eq.s32.totalorder %s20, 1
    %p43 = por %p41, %p42
    %p45 = scmp.ne.s32.totalorder %s28, %s44
    %p46 = scmp.eq.s32.totalorder %s20, 0
    %p47 = por %p45, %p46
    %s49 = sadd.s32 %s48, 1
    %p52 = scmp.eq.s32.totalorder %s14, 1
    %p53 = scmp.ne.s32.totalorder %s48, %s50
    %p54 = scmp.eq.s32.totalorder %s14, 0
    %p55 = por %p53, %p54
    %p56 = scmp.ne.s32.totalorder %s48, %s50
    %p57 = scmp.eq.s32.totalorder %s19, 1
    %p58 = por %p56, %p57
    %p59 = scmp.ne.s32.totalorder %s50, %s51
    %p60 = scmp.eq.s32.totalorder %s19, 0
    %p61 = por %p59, %p60
    %p62 = scmp.ne.s32.totalorder %s50, %s51
    %p63 = scmp.eq.s32.totalorder %s20, 1
    %p64 = por %p62, %p63
    %p66 = scmp.ne.s32.totalorder %s51, %s65
    %p67 = scmp.eq.s32.totalorder %s20, 0
    %p68 = por %p66, %p67
    %s69 = ssub.s32 %s14, %s21
    %p70 = scmp.eq.s32.totalorder %s69, 0
    %s72 = sadd.s32 %s71, 1
    %s73 = scalar_select %p70, %s71, %s72
    %p76 = pneg %p70
    %p77 = scmp.eq.s32.totalorder %s14, 1
    %p78 = por %p76, %p77
    %p79 = scmp.ne.s32.totalorder %s71, %s74
    %p80 = scmp.eq.s32.totalorder %s14, 0
    %p81 = por %p79, %p80
    %p82 = scmp.ne.s32.totalorder %s71, %s74
    %p83 = scmp.eq.s32.totalorder %s19, 1
    %p84 = por %p82, %p83
    %p85 = scmp.ne.s32.totalorder %s74, %s75
    %p86 = scmp.eq.s32.totalorder %s19, 0
    %p87 = por %p85, %p86
    %p88 = scmp.ne.s32.totalorder %s74, %s75
    %p89 = scmp.eq.s32.totalorder %s20, 1
    %p90 = por %p88, %p89
    %p92 = scmp.ne.s32.totalorder %s75, %s91
    %p93 = scmp.eq.s32.totalorder %s20, 0
    %p94 = por %p92, %p93
    %s96 = sadd.s32 %s95, 1
    %p99 = scmp.eq.s32.totalorder %s14, 1
    %p100 = scmp.ne.s32.totalorder %s95, %s97
    %p101 = scmp.eq.s32.totalorder %s14, 0
    %p102 = por %p100, %p101
    %p103 = scmp.ne.s32.totalorder %s95, %s97
    %p104 = scmp.eq.s32.totalorder %s19, 1
    %p105 = por %p103, %p104
    %p106 = scmp.ne.s32.totalorder %s97, %s98
    %p107 = scmp.eq.s32.totalorder %s19, 0
    %p108 = por %p106, %p107
    %p109 = scmp.ne.s32.totalorder %s97, %s98
    %p110 = scmp.eq.s32.totalorder %s20, 1
    %p111 = por %p109, %p110
    %p113 = scmp.ne.s32.totalorder %s98, %s112
    %p114 = scmp.eq.s32.totalorder %s20, 0
    %p115 = por %p113, %p114
    %s117 = sadd.s32 %s116, 1
    %p120 = scmp.eq.s32.totalorder %s14, 1
    %p121 = scmp.ne.s32.totalorder %s116, %s118
    %p122 = scmp.eq.s32.totalorder %s14, 0
    %p123 = por %p121, %p122
    %p124 = scmp.ne.s32.totalorder %s116, %s118
    %p125 = scmp.eq.s32.totalorder %s19, 1
    %p126 = por %p124, %p125
    %p127 = scmp.ne.s32.totalorder %s118, %s119
    %p128 = scmp.eq.s32.totalorder %s19, 0
    %p129 = por %p127, %p128
    %p130 = scmp.ne.s32.totalorder %s118, %s119
    %p131 = scmp.eq.s32.totalorder %s20, 1
    %p132 = por %p130, %p131
    %p134 = scmp.ne.s32.totalorder %s119, %s133
    %p135 = scmp.eq.s32.totalorder %s20, 0
    %p136 = por %p134, %p135
    %s138 = sadd.s32 %s137, 1
    %p141 = scmp.eq.s32.totalorder %s14, 1
    %p142 = scmp.ne.s32.totalorder %s137, %s139
    %p143 = scmp.eq.s32.totalorder %s14, 0
    %p144 = por %p142, %p143
    %p145 = scmp.ne.s32.totalorder %s137, %s139
    %p146 = scmp.eq.s32.totalorder %s19, 1
    %p147 = por %p145, %p146
    %p148 = scmp.ne.s32.totalorder %s139, %s140
    %p149 = scmp.eq.s32.totalorder %s19, 0
    %p150 = por %p148, %p149
    %p151 = scmp.ne.s32.totalorder %s139, %s140
    %p152 = scmp.eq.s32.totalorder %s20, 1
    %p153 = por %p151, %p152
    %p155 = scmp.ne.s32.totalorder %s140, %s154
    %p156 = scmp.eq.s32.totalorder %s20, 0
    %p157 = por %p155, %p156
    %s159 = sadd.s32 %s158, 1
    %p162 = scmp.eq.s32.totalorder %s14, 1
    %p163 = scmp.ne.s32.totalorder %s158, %s160
    %p164 = scmp.eq.s32.totalorder %s14, 0
    %p165 = por %p163, %p164
    %p166 = scmp.ne.s32.totalorder %s158, %s160
    %p167 = scmp.eq.s32.totalorder %s19, 1
    %p168 = por %p166, %p167
    %p169 = scmp.ne.s32.totalorder %s160, %s161
    %p170 = scmp.eq.s32.totalorder %s19, 0
    %p171 = por %p169, %p170
    %p172 = scmp.ne.s32.totalorder %s160, %s161
    %p173 = scmp.eq.s32.totalorder %s20, 1
    %p174 = por %p172, %p173
    %p176 = scmp.ne.s32.totalorder %s161, %s175
    %p177 = scmp.eq.s32.totalorder %s20, 0
    %p178 = por %p176, %p177
    %s180 = sadd.s32 %s179, 1
    %p183 = scmp.eq.s32.totalorder %s14, 1
    %p184 = scmp.ne.s32.totalorder %s179, %s181
    %p185 = scmp.eq.s32.totalorder %s14, 0
    %p186 = por %p184, %p185
    %p187 = scmp.ne.s32.totalorder %s179, %s181
    %p188 = scmp.eq.s32.totalorder %s19, 1
    %p189 = por %p187, %p188
    %p190 = scmp.ne.s32.totalorder %s181, %s182
    %p191 = scmp.eq.s32.totalorder %s19, 0
    %p192 = por %p190, %p191
    %p193 = scmp.ne.s32.totalorder %s181, %s182
    %p194 = scmp.eq.s32.totalorder %s20, 1
    %p195 = por %p193, %p194
    %p197 = scmp.ne.s32.totalorder %s182, %s196
    %p198 = scmp.eq.s32.totalorder %s20, 0
    %p199 = por %p197, %p198
    %s200 = ssub.s32 %s14, %s21
    %p201 = scmp.eq.s32.totalorder %s200, 0
    %s203 = sadd.s32 %s202, 1
    %s204 = scalar_select %p201, %s202, %s203
    %p207 = pneg %p201
    %p208 = scmp.eq.s32.totalorder %s14, 1
    %p209 = por %p207, %p208
    %p210 = scmp.ne.s32.totalorder %s202, %s205
    %p211 = scmp.eq.s32.totalorder %s14, 0
    %p212 = por %p210, %p211
    %p213 = scmp.ne.s32.totalorder %s202, %s205
    %p214 = scmp.eq.s32.totalorder %s19, 1
    %p215 = por %p213, %p214
    %p216 = scmp.ne.s32.totalorder %s205, %s206
    %p217 = scmp.eq.s32.totalorder %s19, 0
    %p218 = por %p216, %p217
    %p219 = scmp.ne.s32.totalorder %s205, %s206
    %p220 = scmp.eq.s32.totalorder %s20, 1
    %p221 = por %p219, %p220
    %p223 = scmp.ne.s32.totalorder %s206, %s222
    %p224 = scmp.eq.s32.totalorder %s20, 0
    %p225 = por %p223, %p224
    %p226 = scmp.le.s32.totalorder 1, %s14
    %p227 = scmp.lt.s32.totalorder %s14, 3
    %p228 = pnand %p226, %p227
    %p229 = pneg %p228
    // Predicated region
    $region9: #{gated_block.3} parent=5 // pred_check
      _
    $region10: #{gated_block.3} parent=5 // pred_check_branch
      %231 = sbr.rel (%p228) target = $region12
    $region11: #{gated_block.3} parent=5 // pred_region
      %s232 = ssub.s32 %s14, 1
      // Predicated region
      $region13: #{gated_block.3} parent=11 // pred_check
        %p233 = pneg %p61
      $region14: #{gated_block.3} parent=11 // pred_check_branch
        %235 = sbr.rel (%p233) target = $region16
      $region15: #{gated_block.3} parent=11 // pred_region
        _
      $region16: #{gated_block.3} parent=11 // pred_fallthru
        _
      // Predicated region
      $region17: #{gated_block.3} parent=11 // pred_check
        %p236 = pneg %p108
      $region18: #{gated_block.3} parent=11 // pred_check_branch
        %238 = sbr.rel (%p236) target = $region20
      $region19: #{gated_block.3} parent=11 // pred_region
        _
      $region20: #{gated_block.3} parent=11 // pred_fallthru
        _
      // Predicated region
      $region21: #{gated_block.3} parent=11 // pred_check
        %p239 = pneg %p129
      $region22: #{gated_block.3} parent=11 // pred_check_branch
        %241 = sbr.rel (%p239) target = $region24
      $region23: #{gated_block.3} parent=11 // pred_region
        _
      $region24: #{gated_block.3} parent=11 // pred_fallthru
        _
      // Predicated region
      $region25: #{gated_block.3} parent=11 // pred_check
        %p242 = pneg %p150
      $region26: #{gated_block.3} parent=11 // pred_check_branch
        %244 = sbr.rel (%p242) target = $region28
      $region27: #{gated_block.3} parent=11 // pred_region
        _
      $region28: #{gated_block.3} parent=11 // pred_fallthru
        _
      // Predicated region
      $region29: #{gated_block.3} parent=11 // pred_check
        %p245 = pneg %p171
      $region30: #{gated_block.3} parent=11 // pred_check_branch
        %247 = sbr.rel (%p245) target = $region32
      $region31: #{gated_block.3} parent=11 // pred_region
        _
      $region32: #{gated_block.3} parent=11 // pred_fallthru
        _
      // Predicated region
      $region33: #{gated_block.3} parent=11 // pred_check
        %p248 = pneg %p192
      $region34: #{gated_block.3} parent=11 // pred_check_branch
        %250 = sbr.rel (%p248) target = $region36
      $region35: #{gated_block.3} parent=11 // pred_region
        _
      $region36: #{gated_block.3} parent=11 // pred_fallthru
        _
    $region12: #{gated_block.3} parent=5 // pred_fallthru
      _
    %p251 = scmp.lt.s32.totalorder %s14, 2
    // Predicated region
    $region37: #{gated_block.3} parent=5 // pred_check
      %p252 = pneg %p251
    $region38: #{gated_block.3} parent=5 // pred_check_branch
      %254 = sbr.rel (%p252) target = $region40
    $region39: #{gated_block.3} parent=5 // pred_region
      // Predicated region
      $region41: #{gated_block.3} parent=39 // pred_check
        %p255 = pneg %p34
      $region42: #{gated_block.3} parent=39 // pred_check_branch
        %257 = sbr.rel (%p255) target = $region44
      $region43: #{gated_block.3} parent=39 // pred_region
        %s258 = smul.u32 16, %s14
        %p259 = scmp.lt.s32.totalorder %s258, 31
        %s260 = scalar_select %p259, %s258, 31
        %s261 = smul.addr %s260, 2
        %s262 = smul.addr %s261, 4
        %s263 = scalar_lea.vmem %s0, %s262
        %s264 = smul.u32 16, %s14
      $region44: #{gated_block.3} parent=39 // pred_fallthru
        _
      // Predicated region
      $region45: #{gated_block.3} parent=39 // pred_check
        %p265 = pneg %p81
      $region46: #{gated_block.3} parent=39 // pred_check_branch
        %267 = sbr.rel (%p265) target = $region48
      $region47: #{gated_block.3} parent=39 // pred_region
        %s268 = smul.u32 16, %s14
        %p269 = scmp.lt.s32.totalorder %s268, 31
        %s270 = scalar_select %p269, %s268, 31
        %s271 = smul.addr %s270, 8
        %s272 = scalar_lea.vmem %s2, %s271
        %s273 = smul.u32 16, %s14
      $region48: #{gated_block.3} parent=39 // pred_fallthru
        _
    $region40: #{gated_block.3} parent=5 // pred_fallthru
      _
    %p274 = scmp.le.s32.totalorder 1, %s14
    %p275 = scmp.lt.s32.totalorder %s14, 3
    %p276 = pnand %p274, %p275
    %p277 = pneg %p276
    // Predicated region
    $region49: #{gated_block.3} parent=5 // pred_check
      _
    $region50: #{gated_block.3} parent=5 // pred_check_branch
      %279 = sbr.rel (%p276) target = $region52
    $region51: #{gated_block.3} parent=5 // pred_region
      %s280 = ssub.s32 %s14, 1
      %s281 = smul.u32 16, %s19
      %p282 = scmp.lt.s32.totalorder %s281, 31
      %s283 = scalar_select %p282, %s281, 31
      %s284 = smul.addr %s283, 2
      %s285 = smul.addr %s284, 4
      %s286 = scalar_lea.vmem %s0, %s285
      %p287 = pneg %p40
      %p288 = pneg %p37
      %p289 = pneg %p61
      %p290 = pneg %p58
      %s291 = smul.u32 16, %s19
      %p292 = scmp.lt.s32.totalorder %s291, 31
      %s293 = scalar_select %p292, %s291, 31
      %s294 = smul.addr %s293, 8
      %s295 = scalar_lea.vmem %s2, %s294
      %p296 = pneg %p87
      %p297 = pneg %p84
      %p298 = pneg %p108
      %p299 = pneg %p105
      %p300 = pneg %p129
      %p301 = pneg %p126
      %p302 = pneg %p150
      %p303 = pneg %p147
      %p304 = pneg %p171
      %p305 = pneg %p168
      %p306 = pneg %p192
      %p307 = pneg %p189
      %p308 = pneg %p218
      %p309 = pneg %p215
      %s310 = smul.u32 16, %s19
      %p311 = scmp.lt.s32.totalorder %s310, 31
      %s312 = scalar_select %p311, %s310, 31
      %s313 = smul.addr %s312, 8
      %s314 = scalar_lea.vmem %s8, %s313
      %s315 = smul.u32 16, %s19
      %p316 = scmp.lt.s32.totalorder %s315, 31
      %s317 = scalar_select %p316, %s315, 31
      %s318 = smul.addr %s317, 2
      %s319 = smul.addr %s318, 4
      %s320 = scalar_lea.vmem %s0, %s319
      %s321 = smul.u32 16, %s19
      %s322 = smul.u32 16, %s19
      %p323 = scmp.lt.s32.totalorder %s322, 31
      %s324 = scalar_select %p323, %s322, 31
      %s325 = smul.addr %s324, 8
      %s326 = scalar_lea.vmem %s2, %s325
      %s327 = smul.u32 16, %s19
      %s328 = smul.u32 16, %s19
      %p329 = scmp.lt.s32.totalorder %s328, 31
      %s330 = scalar_select %p329, %s328, 31
      %s331 = smul.addr %s330, 8
      %s332 = scalar_lea.vmem %s8, %s331
      %s333 = smul.u32 16, %s19
      %v335 = vld [vmem:[%s320] sm:$0xff]
      %v336 = vld [vmem:[%s320 + $0x8] sm:$0xff]
      %v337 = vld [vmem:[%s320 + $0x10] sm:$0xff]
      %v338 = vld [vmem:[%s320 + $0x18] sm:$0xff]
      %v339 = vld [vmem:[%s320 + $0x20] sm:$0xff]
      %v340 = vld [vmem:[%s320 + $0x28] sm:$0xff]
      %v341 = vld [vmem:[%s320 + $0x30] sm:$0xff]
      %v342 = vld [vmem:[%s320 + $0x38] sm:$0xff]
      %v343 = vld [vmem:[%s320 + $0x40] sm:$0xff]
      %v344 = vld [vmem:[%s320 + $0x48] sm:$0xff]
      %v345 = vld [vmem:[%s320 + $0x50] sm:$0xff]
      %v346 = vld [vmem:[%s320 + $0x58] sm:$0xff]
      %v347 = vld [vmem:[%s320 + $0x60] sm:$0xff]
      %v348 = vld [vmem:[%s320 + $0x68] sm:$0xff]
      %v349 = vld [vmem:[%s320 + $0x70] sm:$0xff]
      %v350 = vld [vmem:[%s320 + $0x78] sm:$0xff]
      %v351 = vld [vmem:[%s1] sm:$0xff]
      %v352 = vld [vmem:[%s1 + $0x8] sm:$0xff]
      %v353 = vld [vmem:[%s1 + $0x10] sm:$0xff]
      %v354 = vld [vmem:[%s1 + $0x18] sm:$0xff]
      %v355 = vld [vmem:[%s1 + $0x20] sm:$0xff]
      %v356 = vld [vmem:[%s1 + $0x28] sm:$0xff]
      %v357 = vld [vmem:[%s1 + $0x30] sm:$0xff]
      %v358 = vld [vmem:[%s1 + $0x38] sm:$0xff]
      %v359 = vld [vmem:[%s1 + $0x40] sm:$0xff]
      %v360 = vld [vmem:[%s1 + $0x48] sm:$0xff]
      %v361 = vld [vmem:[%s1 + $0x50] sm:$0xff]
      %v362 = vld [vmem:[%s1 + $0x58] sm:$0xff]
      %v363 = vld [vmem:[%s1 + $0x60] sm:$0xff]
      %v364 = vld [vmem:[%s1 + $0x68] sm:$0xff]
      %v365 = vld [vmem:[%s1 + $0x70] sm:$0xff]
      %v366 = vld [vmem:[%s1 + $0x78] sm:$0xff]
      %v367 = vld [vmem:[%s1 + $0x80] sm:$0xff]
      %v368 = vld [vmem:[%s1 + $0x88] sm:$0xff]
      %v369 = vld [vmem:[%s1 + $0x90] sm:$0xff]
      %v370 = vld [vmem:[%s1 + $0x98] sm:$0xff]
      %v371 = vld [vmem:[%s1 + $0xa0] sm:$0xff]
      %v372 = vld [vmem:[%s1 + $0xa8] sm:$0xff]
      %v373 = vld [vmem:[%s1 + $0xb0] sm:$0xff]
      %v374 = vld [vmem:[%s1 + $0xb8] sm:$0xff]
      %v375 = vld [vmem:[%s1 + $0xc0] sm:$0xff]
      %v376 = vld [vmem:[%s1 + $0xc8] sm:$0xff]
      %v377 = vld [vmem:[%s1 + $0xd0] sm:$0xff]
      %v378 = vld [vmem:[%s1 + $0xd8] sm:$0xff]
      %v379 = vld [vmem:[%s1 + $0xe0] sm:$0xff]
      %v380 = vld [vmem:[%s1 + $0xe8] sm:$0xff]
      %v381 = vld [vmem:[%s1 + $0xf0] sm:$0xff]
      %v382 = vld [vmem:[%s1 + $0xf8] sm:$0xff]
      %v383 = vld [vmem:[%s3] sm:$0x3]
      %v385 = vperm.slane %v383, 0
      %v386 = vperm.slane %v383, 1
      %v405 = vunpack.c.l.b16 %v335
      %v406 = vunpack.c.h.b16 %v335
      %v407 = vunpack.c.l.b16 %v336
      %v408 = vunpack.c.h.b16 %v336
      %v409 = vunpack.c.l.b16 %v337
      %v410 = vunpack.c.h.b16 %v337
      %v411 = vunpack.c.l.b16 %v338
      %v412 = vunpack.c.h.b16 %v338
      %v413 = vunpack.c.l.b16 %v339
      %v414 = vunpack.c.h.b16 %v339
      %v415 = vunpack.c.l.b16 %v340
      %v416 = vunpack.c.h.b16 %v340
      %v417 = vunpack.c.l.b16 %v341
      %v418 = vunpack.c.h.b16 %v341
      %v419 = vunpack.c.l.b16 %v342
      %v420 = vunpack.c.h.b16 %v342
      %v421 = vunpack.c.l.b16 %v343
      %v422 = vunpack.c.h.b16 %v343
      %v423 = vunpack.c.l.b16 %v344
      %v424 = vunpack.c.h.b16 %v344
      %v425 = vunpack.c.l.b16 %v345
      %v426 = vunpack.c.h.b16 %v345
      %v427 = vunpack.c.l.b16 %v346
      %v428 = vunpack.c.h.b16 %v346
      %v429 = vunpack.c.l.b16 %v347
      %v430 = vunpack.c.h.b16 %v347
      %v431 = vunpack.c.l.b16 %v348
      %v432 = vunpack.c.h.b16 %v348
      %v433 = vunpack.c.l.b16 %v349
      %v434 = vunpack.c.h.b16 %v349
      %v435 = vunpack.c.l.b16 %v350
      %v436 = vunpack.c.h.b16 %v350
      %v437 = vpack.c.b16 %v407, %v405
      %v438 = vpack.c.b16 %v408, %v406
      %v439 = vpack.c.b16 %v411, %v409
      %v440 = vpack.c.b16 %v412, %v410
      %v441 = vpack.c.b16 %v415, %v413
      %v442 = vpack.c.b16 %v416, %v414
      %v443 = vpack.c.b16 %v419, %v417
      %v444 = vpack.c.b16 %v420, %v418
      %v445 = vpack.c.b16 %v423, %v421
      %v446 = vpack.c.b16 %v424, %v422
      %v447 = vpack.c.b16 %v427, %v425
      %v448 = vpack.c.b16 %v428, %v426
      %v449 = vpack.c.b16 %v431, %v429
      %v450 = vpack.c.b16 %v432, %v430
      %v451 = vpack.c.b16 %v435, %v433
      %v452 = vpack.c.b16 %v436, %v434
      %v501 = vunpack.c.l.b16 %v351
      %v502 = vunpack.c.h.b16 %v351
      %v503 = vunpack.c.l.b16 %v352
      %v504 = vunpack.c.h.b16 %v352
      %v505 = vunpack.c.l.b16 %v353
      %v506 = vunpack.c.h.b16 %v353
      %v507 = vunpack.c.l.b16 %v354
      %v508 = vunpack.c.h.b16 %v354
      %v509 = vunpack.c.l.b16 %v355
      %v510 = vunpack.c.h.b16 %v355
      %v511 = vunpack.c.l.b16 %v356
      %v512 = vunpack.c.h.b16 %v356
      %v513 = vunpack.c.l.b16 %v357
      %v514 = vunpack.c.h.b16 %v357
      %v515 = vunpack.c.l.b16 %v358
      %v516 = vunpack.c.h.b16 %v358
      %v517 = vunpack.c.l.b16 %v359
      %v518 = vunpack.c.h.b16 %v359
      %v519 = vunpack.c.l.b16 %v360
      %v520 = vunpack.c.h.b16 %v360
      %v521 = vunpack.c.l.b16 %v361
      %v522 = vunpack.c.h.b16 %v361
      %v523 = vunpack.c.l.b16 %v362
      %v524 = vunpack.c.h.b16 %v362
      %v525 = vunpack.c.l.b16 %v363
      %v526 = vunpack.c.h.b16 %v363
      %v527 = vunpack.c.l.b16 %v364
      %v528 = vunpack.c.h.b16 %v364
      %v529 = vunpack.c.l.b16 %v365
      %v530 = vunpack.c.h.b16 %v365
      %v531 = vunpack.c.l.b16 %v366
      %v532 = vunpack.c.h.b16 %v366
      %v533 = vunpack.c.l.b16 %v367
      %v534 = vunpack.c.h.b16 %v367
      %v535 = vunpack.c.l.b16 %v368
      %v536 = vunpack.c.h.b16 %v368
      %v537 = vunpack.c.l.b16 %v369
      %v538 = vunpack.c.h.b16 %v369
      %v539 = vunpack.c.l.b16 %v370
      %v540 = vunpack.c.h.b16 %v370
      %v541 = vunpack.c.l.b16 %v371
      %v542 = vunpack.c.h.b16 %v371
      %v543 = vunpack.c.l.b16 %v372
      %v544 = vunpack.c.h.b16 %v372
      %v545 = vunpack.c.l.b16 %v373
      %v546 = vunpack.c.h.b16 %v373
      %v547 = vunpack.c.l.b16 %v374
      %v548 = vunpack.c.h.b16 %v374
      %v549 = vunpack.c.l.b16 %v375
      %v550 = vunpack.c.h.b16 %v375
      %v551 = vunpack.c.l.b16 %v376
      %v552 = vunpack.c.h.b16 %v376
      %v553 = vunpack.c.l.b16 %v377
      %v554 = vunpack.c.h.b16 %v377
      %v555 = vunpack.c.l.b16 %v378
      %v556 = vunpack.c.h.b16 %v378
      %v557 = vunpack.c.l.b16 %v379
      %v558 = vunpack.c.h.b16 %v379
      %v559 = vunpack.c.l.b16 %v380
      %v560 = vunpack.c.h.b16 %v380
      %v561 = vunpack.c.l.b16 %v381
      %v562 = vunpack.c.h.b16 %v381
      %v563 = vunpack.c.l.b16 %v382
      %v564 = vunpack.c.h.b16 %v382
      %v565 = vpack.c.b16 %v503, %v501
      %v566 = vpack.c.b16 %v504, %v502
      %v567 = vpack.c.b16 %v507, %v505
      %v568 = vpack.c.b16 %v508, %v506
      %v569 = vpack.c.b16 %v511, %v509
      %v570 = vpack.c.b16 %v512, %v510
      %v571 = vpack.c.b16 %v515, %v513
      %v572 = vpack.c.b16 %v516, %v514
      %v573 = vpack.c.b16 %v519, %v517
      %v574 = vpack.c.b16 %v520, %v518
      %v575 = vpack.c.b16 %v523, %v521
      %v576 = vpack.c.b16 %v524, %v522
      %v577 = vpack.c.b16 %v527, %v525
      %v578 = vpack.c.b16 %v528, %v526
      %v579 = vpack.c.b16 %v531, %v529
      %v580 = vpack.c.b16 %v532, %v530
      %v581 = vpack.c.b16 %v535, %v533
      %v582 = vpack.c.b16 %v536, %v534
      %v583 = vpack.c.b16 %v539, %v537
      %v584 = vpack.c.b16 %v540, %v538
      %v585 = vpack.c.b16 %v543, %v541
      %v586 = vpack.c.b16 %v544, %v542
      %v587 = vpack.c.b16 %v547, %v545
      %v588 = vpack.c.b16 %v548, %v546
      %v589 = vpack.c.b16 %v551, %v549
      %v590 = vpack.c.b16 %v552, %v550
      %v591 = vpack.c.b16 %v555, %v553
      %v592 = vpack.c.b16 %v556, %v554
      %v593 = vpack.c.b16 %v559, %v557
      %v594 = vpack.c.b16 %v560, %v558
      %v595 = vpack.c.b16 %v563, %v561
      %v596 = vpack.c.b16 %v564, %v562
      %629 = vmatpush.bf16.msra.mxu0 %v579
      %630 = vmatpush.bf16.msra.mxu0 %v577
      %631 = vmatpush.bf16.msra.mxu0 %v575
      %632 = vmatpush.bf16.msra.mxu0 %v573
      %633 = vmatpush.bf16.msra.mxu0 %v571
      %634 = vmatpush.bf16.msra.mxu0 %v569
      %635 = vmatpush.bf16.msra.mxu0 %v567
      %636 = vmatpush.bf16.msra.mxu0 %v565
      %637 = vmatmul.bf16.gmra.mxu0 %v437
      %v638 = vpop.f32.mrf.mxu0
      %v639 = vadd.f32 %v385, %v638
      %v640 = vpop.f32.mrf.mxu0
      %v641 = vadd.f32 %v385, %v640
      %642 = vmatmul.bf16.gmra.mxu0 %v439
      %v643 = vpop.f32.mrf.mxu0
      %v644 = vadd.f32 %v385, %v643
      %v645 = vpop.f32.mrf.mxu0
      %v646 = vadd.f32 %v385, %v645
      %647 = vmatmul.bf16.gmra.mxu0 %v441
      %v648 = vpop.f32.mrf.mxu0
      %v649 = vadd.f32 %v385, %v648
      %v650 = vpop.f32.mrf.mxu0
      %v651 = vadd.f32 %v385, %v650
      %652 = vmatmul.bf16.gmra.mxu0 %v443
      %v653 = vpop.f32.mrf.mxu0
      %v654 = vadd.f32 %v385, %v653
      %v655 = vpop.f32.mrf.mxu0
      %v656 = vadd.f32 %v385, %v655
      %657 = vmatmul.bf16.gmra.mxu0 %v445
      %v658 = vpop.f32.mrf.mxu0
      %v659 = vadd.f32 %v385, %v658
      %v660 = vpop.f32.mrf.mxu0
      %v661 = vadd.f32 %v385, %v660
      %662 = vmatmul.bf16.gmra.mxu0 %v447
      %v663 = vpop.f32.mrf.mxu0
      %v664 = vadd.f32 %v385, %v663
      %v665 = vpop.f32.mrf.mxu0
      %v666 = vadd.f32 %v385, %v665
      %667 = vmatmul.bf16.gmra.mxu0 %v449
      %v668 = vpop.f32.mrf.mxu0
      %v669 = vadd.f32 %v385, %v668
      %v670 = vpop.f32.mrf.mxu0
      %v671 = vadd.f32 %v385, %v670
      %672 = vmatmul.bf16.gmra.mxu0 %v451
      %v673 = vpop.f32.mrf.mxu0
      %v674 = vadd.f32 %v385, %v673
      %v675 = vpop.f32.mrf.mxu0
      %v676 = vadd.f32 %v385, %v675
      %677 = vdwg.mxu0
      %678 = vmatpush.bf16.msra.mxu0 %v595
      %679 = vmatpush.bf16.msra.mxu0 %v593
      %680 = vmatpush.bf16.msra.mxu0 %v591
      %681 = vmatpush.bf16.msra.mxu0 %v589
      %682 = vmatpush.bf16.msra.mxu0 %v587
      %683 = vmatpush.bf16.msra.mxu0 %v585
      %684 = vmatpush.bf16.msra.mxu0 %v583
      %685 = vmatpush.bf16.msra.mxu0 %v581
      %686 = vmatmul.bf16.gmra.mxu0 %v438
      %v687 = vpop.f32.mrf.mxu0
      %v688 = vadd.f32 %v639, %v687
      %v689 = vpop.f32.mrf.mxu0
      %v690 = vadd.f32 %v641, %v689
      %691 = vmatmul.bf16.gmra.mxu0 %v440
      %v692 = vpop.f32.mrf.mxu0
      %v693 = vadd.f32 %v644, %v692
      %v694 = vpop.f32.mrf.mxu0
      %v695 = vadd.f32 %v646, %v694
      %696 = vmatmul.bf16.gmra.mxu0 %v442
      %v697 = vpop.f32.mrf.mxu0
      %v698 = vadd.f32 %v649, %v697
      %v699 = vpop.f32.mrf.mxu0
      %v700 = vadd.f32 %v651, %v699
      %701 = vmatmul.bf16.gmra.mxu0 %v444
      %v702 = vpop.f32.mrf.mxu0
      %v703 = vadd.f32 %v654, %v702
      %v704 = vpop.f32.mrf.mxu0
      %v705 = vadd.f32 %v656, %v704
      %706 = vmatmul.bf16.gmra.mxu0 %v446
      %v707 = vpop.f32.mrf.mxu0
      %v708 = vadd.f32 %v659, %v707
      %v709 = vpop.f32.mrf.mxu0
      %v710 = vadd.f32 %v661, %v709
      %711 = vmatmul.bf16.gmra.mxu0 %v448
      %v712 = vpop.f32.mrf.mxu0
      %v713 = vadd.f32 %v664, %v712
      %v714 = vpop.f32.mrf.mxu0
      %v715 = vadd.f32 %v666, %v714
      %716 = vmatmul.bf16.gmra.mxu0 %v450
      %v717 = vpop.f32.mrf.mxu0
      %v718 = vadd.f32 %v669, %v717
      %v719 = vpop.f32.mrf.mxu0
      %v720 = vadd.f32 %v671, %v719
      %721 = vmatmul.bf16.gmra.mxu0 %v452
      %v722 = vpop.f32.mrf.mxu0
      %v723 = vadd.f32 %v674, %v722
      %v724 = vpop.f32.mrf.mxu0
      %v725 = vadd.f32 %v676, %v724
      %726 = vdwg.mxu0
      %727 = vmatpush.bf16.msra.mxu0 %v580
      %728 = vmatpush.bf16.msra.mxu0 %v578
      %729 = vmatpush.bf16.msra.mxu0 %v576
      %730 = vmatpush.bf16.msra.mxu0 %v574
      %731 = vmatpush.bf16.msra.mxu0 %v572
      %732 = vmatpush.bf16.msra.mxu0 %v570
      %733 = vmatpush.bf16.msra.mxu0 %v568
      %734 = vmatpush.bf16.msra.mxu0 %v566
      %735 = vmatmul.bf16.gmra.mxu0 %v437
      %v736 = vpop.f32.mrf.mxu0
      %v737 = vadd.f32 %v386, %v736
      %v738 = vpop.f32.mrf.mxu0
      %v739 = vadd.f32 %v386, %v738
      %740 = vmatmul.bf16.gmra.mxu0 %v439
      %v741 = vpop.f32.mrf.mxu0
      %v742 = vadd.f32 %v386, %v741
      %v743 = vpop.f32.mrf.mxu0
      %v744 = vadd.f32 %v386, %v743
      %745 = vmatmul.bf16.gmra.mxu0 %v441
      %v746 = vpop.f32.mrf.mxu0
      %v747 = vadd.f32 %v386, %v746
      %v748 = vpop.f32.mrf.mxu0
      %v749 = vadd.f32 %v386, %v748
      %750 = vmatmul.bf16.gmra.mxu0 %v443
      %v751 = vpop.f32.mrf.mxu0
      %v752 = vadd.f32 %v386, %v751
      %v753 = vpop.f32.mrf.mxu0
      %v754 = vadd.f32 %v386, %v753
      %755 = vmatmul.bf16.gmra.mxu0 %v445
      %v756 = vpop.f32.mrf.mxu0
      %v757 = vadd.f32 %v386, %v756
      %v758 = vpop.f32.mrf.mxu0
      %v759 = vadd.f32 %v386, %v758
      %760 = vmatmul.bf16.gmra.mxu0 %v447
      %v761 = vpop.f32.mrf.mxu0
      %v762 = vadd.f32 %v386, %v761
      %v763 = vpop.f32.mrf.mxu0
      %v764 = vadd.f32 %v386, %v763
      %765 = vmatmul.bf16.gmra.mxu0 %v449
      %v766 = vpop.f32.mrf.mxu0
      %v767 = vadd.f32 %v386, %v766
      %v768 = vpop.f32.mrf.mxu0
      %v769 = vadd.f32 %v386, %v768
      %770 = vmatmul.bf16.gmra.mxu0 %v451
      %v771 = vpop.f32.mrf.mxu0
      %v772 = vadd.f32 %v386, %v771
      %v773 = vpop.f32.mrf.mxu0
      %v774 = vadd.f32 %v386, %v773
      %775 = vdwg.mxu0
      %776 = vmatpush.bf16.msra.mxu0 %v596
      %777 = vmatpush.bf16.msra.mxu0 %v594
      %778 = vmatpush.bf16.msra.mxu0 %v592
      %779 = vmatpush.bf16.msra.mxu0 %v590
      %780 = vmatpush.bf16.msra.mxu0 %v588
      %781 = vmatpush.bf16.msra.mxu0 %v586
      %782 = vmatpush.bf16.msra.mxu0 %v584
      %783 = vmatpush.bf16.msra.mxu0 %v582
      %784 = vmatmul.bf16.gmra.mxu0 %v438
      %v785 = vpop.f32.mrf.mxu0
      %v786 = vadd.f32 %v737, %v785
      %v787 = vpop.f32.mrf.mxu0
      %v788 = vadd.f32 %v739, %v787
      %789 = vmatmul.bf16.gmra.mxu0 %v440
      %v790 = vpop.f32.mrf.mxu0
      %v791 = vadd.f32 %v742, %v790
      %v792 = vpop.f32.mrf.mxu0
      %v793 = vadd.f32 %v744, %v792
      %794 = vmatmul.bf16.gmra.mxu0 %v442
      %v795 = vpop.f32.mrf.mxu0
      %v796 = vadd.f32 %v747, %v795
      %v797 = vpop.f32.mrf.mxu0
      %v798 = vadd.f32 %v749, %v797
      %799 = vmatmul.bf16.gmra.mxu0 %v444
      %v800 = vpop.f32.mrf.mxu0
      %v801 = vadd.f32 %v752, %v800
      %v802 = vpop.f32.mrf.mxu0
      %v803 = vadd.f32 %v754, %v802
      %804 = vmatmul.bf16.gmra.mxu0 %v446
      %v805 = vpop.f32.mrf.mxu0
      %v806 = vadd.f32 %v757, %v805
      %v807 = vpop.f32.mrf.mxu0
      %v808 = vadd.f32 %v759, %v807
      %809 = vmatmul.bf16.gmra.mxu0 %v448
      %v810 = vpop.f32.mrf.mxu0
      %v811 = vadd.f32 %v762, %v810
      %v812 = vpop.f32.mrf.mxu0
      %v813 = vadd.f32 %v764, %v812
      %814 = vmatmul.bf16.gmra.mxu0 %v450
      %v815 = vpop.f32.mrf.mxu0
      %v816 = vadd.f32 %v767, %v815
      %v817 = vpop.f32.mrf.mxu0
      %v818 = vadd.f32 %v769, %v817
      %819 = vmatmul.bf16.gmra.mxu0 %v452
      %v820 = vpop.f32.mrf.mxu0
      %v821 = vadd.f32 %v772, %v820
      %v822 = vpop.f32.mrf.mxu0
      %v823 = vadd.f32 %v774, %v822
      %824 = vdwg.mxu0
      %v825 = vxor.u32 %v786, 2147483648
      %v826 = vxor.u32 %v788, 2147483648
      %v827 = vxor.u32 %v791, 2147483648
      %v828 = vxor.u32 %v793, 2147483648
      %v829 = vxor.u32 %v796, 2147483648
      %v830 = vxor.u32 %v798, 2147483648
      %v831 = vxor.u32 %v801, 2147483648
      %v832 = vxor.u32 %v803, 2147483648
      %v833 = vxor.u32 %v806, 2147483648
      %v834 = vxor.u32 %v808, 2147483648
      %v835 = vxor.u32 %v811, 2147483648
      %v836 = vxor.u32 %v813, 2147483648
      %v837 = vxor.u32 %v816, 2147483648
      %v838 = vxor.u32 %v818, 2147483648
      %v839 = vxor.u32 %v821, 2147483648
      %v840 = vxor.u32 %v823, 2147483648
      %v841 = vmul.f32 %v825, 1.442695
      %v842 = vpow.pop %v841
      %v843 = vmul.f32 %v826, 1.442695
      %v844 = vpow.pop %v843
      %v845 = vmul.f32 %v827, 1.442695
      %v846 = vpow.pop %v845
      %v847 = vmul.f32 %v828, 1.442695
      %v848 = vpow.pop %v847
      %v849 = vmul.f32 %v829, 1.442695
      %v850 = vpow.pop %v849
      %v851 = vmul.f32 %v830, 1.442695
      %v852 = vpow.pop %v851
      %v853 = vmul.f32 %v831, 1.442695
      %v854 = vpow.pop %v853
      %v855 = vmul.f32 %v832, 1.442695
      %v856 = vpow.pop %v855
      %v857 = vmul.f32 %v833, 1.442695
      %v858 = vpow.pop %v857
      %v859 = vmul.f32 %v834, 1.442695
      %v860 = vpow.pop %v859
      %v861 = vmul.f32 %v835, 1.442695
      %v862 = vpow.pop %v861
      %v863 = vmul.f32 %v836, 1.442695
      %v864 = vpow.pop %v863
      %v865 = vmul.f32 %v837, 1.442695
      %v866 = vpow.pop %v865
      %v867 = vmul.f32 %v838, 1.442695
      %v868 = vpow.pop %v867
      %v869 = vmul.f32 %v839, 1.442695
      %v870 = vpow.pop %v869
      %v871 = vmul.f32 %v840, 1.442695
      %v872 = vpow.pop %v871
      %v873 = vadd.f32 %v842, 1.0
      %v874 = vadd.f32 %v844, 1.0
      %v875 = vadd.f32 %v846, 1.0
      %v876 = vadd.f32 %v848, 1.0
      %v877 = vadd.f32 %v850, 1.0
      %v878 = vadd.f32 %v852, 1.0
      %v879 = vadd.f32 %v854, 1.0
      %v880 = vadd.f32 %v856, 1.0
      %v881 = vadd.f32 %v858, 1.0
      %v882 = vadd.f32 %v860, 1.0
      %v883 = vadd.f32 %v862, 1.0
      %v884 = vadd.f32 %v864, 1.0
      %v885 = vadd.f32 %v866, 1.0
      %v886 = vadd.f32 %v868, 1.0
      %v887 = vadd.f32 %v870, 1.0
      %v888 = vadd.f32 %v872, 1.0
      %v889 = vrcp.pop %v873
      %v890 = vmul.f32 %v873, %v889
      %v891 = vsub.f32 1.0, %v890
      %v892 = vmul.f32 %v889, %v891
      %v893 = vadd.f32 %v889, %v892
      %vm894 = vweird.f32 %v873
      %vm895 = vweird.f32 %v889
      %vm896 = vmor %vm894, %vm895
      %v897 = vsel %vm896, %v889, %v893
      %v898 = vand.u32 2147483647, %v873
      %vm899 = vcmp.eq.f32.partialorder %v898, 8.507059e+37
      %v900 = vand.u32 %v873, 2147483648
      %v901 = vor.u32 1.1754944e-38, %v900
      %v902 = vsel %vm899, %v901, %v897
      %v903 = vmul.f32 1.0, %v902
      %v904 = vrcp.pop %v874
      %v905 = vmul.f32 %v874, %v904
      %v906 = vsub.f32 1.0, %v905
      %v907 = vmul.f32 %v904, %v906
      %v908 = vadd.f32 %v904, %v907
      %vm909 = vweird.f32 %v874
      %vm910 = vweird.f32 %v904
      %vm911 = vmor %vm909, %vm910
      %v912 = vsel %vm911, %v904, %v908
      %v913 = vand.u32 2147483647, %v874
      %vm914 = vcmp.eq.f32.partialorder %v913, 8.507059e+37
      %v915 = vand.u32 %v874, 2147483648
      %v916 = vor.u32 1.1754944e-38, %v915
      %v917 = vsel %vm914, %v916, %v912
      %v918 = vmul.f32 1.0, %v917
      %v919 = vrcp.pop %v875
      %v920 = vmul.f32 %v875, %v919
      %v921 = vsub.f32 1.0, %v920
      %v922 = vmul.f32 %v919, %v921
      %v923 = vadd.f32 %v919, %v922
      %vm924 = vweird.f32 %v875
      %vm925 = vweird.f32 %v919
      %vm926 = vmor %vm924, %vm925
      %v927 = vsel %vm926, %v919, %v923
      %v928 = vand.u32 2147483647, %v875
      %vm929 = vcmp.eq.f32.partialorder %v928, 8.507059e+37
      %v930 = vand.u32 %v875, 2147483648
      %v931 = vor.u32 1.1754944e-38, %v930
      %v932 = vsel %vm929, %v931, %v927
      %v933 = vmul.f32 1.0, %v932
      %v934 = vrcp.pop %v876
      %v935 = vmul.f32 %v876, %v934
      %v936 = vsub.f32 1.0, %v935
      %v937 = vmul.f32 %v934, %v936
      %v938 = vadd.f32 %v934, %v937
      %vm939 = vweird.f32 %v876
      %vm940 = vweird.f32 %v934
      %vm941 = vmor %vm939, %vm940
      %v942 = vsel %vm941, %v934, %v938
      %v943 = vand.u32 2147483647, %v876
      %vm944 = vcmp.eq.f32.partialorder %v943, 8.507059e+37
      %v945 = vand.u32 %v876, 2147483648
      %v946 = vor.u32 1.1754944e-38, %v945
      %v947 = vsel %vm944, %v946, %v942
      %v948 = vmul.f32 1.0, %v947
      %v949 = vrcp.pop %v877
      %v950 = vmul.f32 %v877, %v949
      %v951 = vsub.f32 1.0, %v950
      %v952 = vmul.f32 %v949, %v951
      %v953 = vadd.f32 %v949, %v952
      %vm954 = vweird.f32 %v877
      %vm955 = vweird.f32 %v949
      %vm956 = vmor %vm954, %vm955
      %v957 = vsel %vm956, %v949, %v953
      %v958 = vand.u32 2147483647, %v877
      %vm959 = vcmp.eq.f32.partialorder %v958, 8.507059e+37
      %v960 = vand.u32 %v877, 2147483648
      %v961 = vor.u32 1.1754944e-38, %v960
      %v962 = vsel %vm959, %v961, %v957
      %v963 = vmul.f32 1.0, %v962
      %v964 = vrcp.pop %v878
      %v965 = vmul.f32 %v878, %v964
      %v966 = vsub.f32 1.0, %v965
      %v967 = vmul.f32 %v964, %v966
      %v968 = vadd.f32 %v964, %v967
      %vm969 = vweird.f32 %v878
      %vm970 = vweird.f32 %v964
      %vm971 = vmor %vm969, %vm970
      %v972 = vsel %vm971, %v964, %v968
      %v973 = vand.u32 2147483647, %v878
      %vm974 = vcmp.eq.f32.partialorder %v973, 8.507059e+37
      %v975 = vand.u32 %v878, 2147483648
      %v976 = vor.u32 1.1754944e-38, %v975
      %v977 = vsel %vm974, %v976, %v972
      %v978 = vmul.f32 1.0, %v977
      %v979 = vrcp.pop %v879
      %v980 = vmul.f32 %v879, %v979
      %v981 = vsub.f32 1.0, %v980
      %v982 = vmul.f32 %v979, %v981
      %v983 = vadd.f32 %v979, %v982
      %vm984 = vweird.f32 %v879
      %vm985 = vweird.f32 %v979
      %vm986 = vmor %vm984, %vm985
      %v987 = vsel %vm986, %v979, %v983
      %v988 = vand.u32 2147483647, %v879
      %vm989 = vcmp.eq.f32.partialorder %v988, 8.507059e+37
      %v990 = vand.u32 %v879, 2147483648
      %v991 = vor.u32 1.1754944e-38, %v990
      %v992 = vsel %vm989, %v991, %v987
      %v993 = vmul.f32 1.0, %v992
      %v994 = vrcp.pop %v880
      %v995 = vmul.f32 %v880, %v994
      %v996 = vsub.f32 1.0, %v995
      %v997 = vmul.f32 %v994, %v996
      %v998 = vadd.f32 %v994, %v997
      %vm999 = vweird.f32 %v880
      %vm1000 = vweird.f32 %v994
      %vm1001 = vmor %vm999, %vm1000
      %v1002 = vsel %vm1001, %v994, %v998
      %v1003 = vand.u32 2147483647, %v880
      %vm1004 = vcmp.eq.f32.partialorder %v1003, 8.507059e+37
      %v1005 = vand.u32 %v880, 2147483648
      %v1006 = vor.u32 1.1754944e-38, %v1005
      %v1007 = vsel %vm1004, %v1006, %v1002
      %v1008 = vmul.f32 1.0, %v1007
      %v1009 = vrcp.pop %v881
      %v1010 = vmul.f32 %v881, %v1009
      %v1011 = vsub.f32 1.0, %v1010
      %v1012 = vmul.f32 %v1009, %v1011
      %v1013 = vadd.f32 %v1009, %v1012
      %vm1014 = vweird.f32 %v881
      %vm1015 = vweird.f32 %v1009
      %vm1016 = vmor %vm1014, %vm1015
      %v1017 = vsel %vm1016, %v1009, %v1013
      %v1018 = vand.u32 2147483647, %v881
      %vm1019 = vcmp.eq.f32.partialorder %v1018, 8.507059e+37
      %v1020 = vand.u32 %v881, 2147483648
      %v1021 = vor.u32 1.1754944e-38, %v1020
      %v1022 = vsel %vm1019, %v1021, %v1017
      %v1023 = vmul.f32 1.0, %v1022
      %v1024 = vrcp.pop %v882
      %v1025 = vmul.f32 %v882, %v1024
      %v1026 = vsub.f32 1.0, %v1025
      %v1027 = vmul.f32 %v1024, %v1026
      %v1028 = vadd.f32 %v1024, %v1027
      %vm1029 = vweird.f32 %v882
      %vm1030 = vweird.f32 %v1024
      %vm1031 = vmor %vm1029, %vm1030
      %v1032 = vsel %vm1031, %v1024, %v1028
      %v1033 = vand.u32 2147483647, %v882
      %vm1034 = vcmp.eq.f32.partialorder %v1033, 8.507059e+37
      %v1035 = vand.u32 %v882, 2147483648
      %v1036 = vor.u32 1.1754944e-38, %v1035
      %v1037 = vsel %vm1034, %v1036, %v1032
      %v1038 = vmul.f32 1.0, %v1037
      %v1039 = vrcp.pop %v883
      %v1040 = vmul.f32 %v883, %v1039
      %v1041 = vsub.f32 1.0, %v1040
      %v1042 = vmul.f32 %v1039, %v1041
      %v1043 = vadd.f32 %v1039, %v1042
      %vm1044 = vweird.f32 %v883
      %vm1045 = vweird.f32 %v1039
      %vm1046 = vmor %vm1044, %vm1045
      %v1047 = vsel %vm1046, %v1039, %v1043
      %v1048 = vand.u32 2147483647, %v883
      %vm1049 = vcmp.eq.f32.partialorder %v1048, 8.507059e+37
      %v1050 = vand.u32 %v883, 2147483648
      %v1051 = vor.u32 1.1754944e-38, %v1050
      %v1052 = vsel %vm1049, %v1051, %v1047
      %v1053 = vmul.f32 1.0, %v1052
      %v1054 = vrcp.pop %v884
      %v1055 = vmul.f32 %v884, %v1054
      %v1056 = vsub.f32 1.0, %v1055
      %v1057 = vmul.f32 %v1054, %v1056
      %v1058 = vadd.f32 %v1054, %v1057
      %vm1059 = vweird.f32 %v884
      %vm1060 = vweird.f32 %v1054
      %vm1061 = vmor %vm1059, %vm1060
      %v1062 = vsel %vm1061, %v1054, %v1058
      %v1063 = vand.u32 2147483647, %v884
      %vm1064 = vcmp.eq.f32.partialorder %v1063, 8.507059e+37
      %v1065 = vand.u32 %v884, 2147483648
      %v1066 = vor.u32 1.1754944e-38, %v1065
      %v1067 = vsel %vm1064, %v1066, %v1062
      %v1068 = vmul.f32 1.0, %v1067
      %v1069 = vrcp.pop %v885
      %v1070 = vmul.f32 %v885, %v1069
      %v1071 = vsub.f32 1.0, %v1070
      %v1072 = vmul.f32 %v1069, %v1071
      %v1073 = vadd.f32 %v1069, %v1072
      %vm1074 = vweird.f32 %v885
      %vm1075 = vweird.f32 %v1069
      %vm1076 = vmor %vm1074, %vm1075
      %v1077 = vsel %vm1076, %v1069, %v1073
      %v1078 = vand.u32 2147483647, %v885
      %vm1079 = vcmp.eq.f32.partialorder %v1078, 8.507059e+37
      %v1080 = vand.u32 %v885, 2147483648
      %v1081 = vor.u32 1.1754944e-38, %v1080
      %v1082 = vsel %vm1079, %v1081, %v1077
      %v1083 = vmul.f32 1.0, %v1082
      %v1084 = vrcp.pop %v886
      %v1085 = vmul.f32 %v886, %v1084
      %v1086 = vsub.f32 1.0, %v1085
      %v1087 = vmul.f32 %v1084, %v1086
      %v1088 = vadd.f32 %v1084, %v1087
      %vm1089 = vweird.f32 %v886
      %vm1090 = vweird.f32 %v1084
      %vm1091 = vmor %vm1089, %vm1090
      %v1092 = vsel %vm1091, %v1084, %v1088
      %v1093 = vand.u32 2147483647, %v886
      %vm1094 = vcmp.eq.f32.partialorder %v1093, 8.507059e+37
      %v1095 = vand.u32 %v886, 2147483648
      %v1096 = vor.u32 1.1754944e-38, %v1095
      %v1097 = vsel %vm1094, %v1096, %v1092
      %v1098 = vmul.f32 1.0, %v1097
      %v1099 = vrcp.pop %v887
      %v1100 = vmul.f32 %v887, %v1099
      %v1101 = vsub.f32 1.0, %v1100
      %v1102 = vmul.f32 %v1099, %v1101
      %v1103 = vadd.f32 %v1099, %v1102
      %vm1104 = vweird.f32 %v887
      %vm1105 = vweird.f32 %v1099
      %vm1106 = vmor %vm1104, %vm1105
      %v1107 = vsel %vm1106, %v1099, %v1103
      %v1108 = vand.u32 2147483647, %v887
      %vm1109 = vcmp.eq.f32.partialorder %v1108, 8.507059e+37
      %v1110 = vand.u32 %v887, 2147483648
      %v1111 = vor.u32 1.1754944e-38, %v1110
      %v1112 = vsel %vm1109, %v1111, %v1107
      %v1113 = vmul.f32 1.0, %v1112
      %v1114 = vrcp.pop %v888
      %v1115 = vmul.f32 %v888, %v1114
      %v1116 = vsub.f32 1.0, %v1115
      %v1117 = vmul.f32 %v1114, %v1116
      %v1118 = vadd.f32 %v1114, %v1117
      %vm1119 = vweird.f32 %v888
      %vm1120 = vweird.f32 %v1114
      %vm1121 = vmor %vm1119, %vm1120
      %v1122 = vsel %vm1121, %v1114, %v1118
      %v1123 = vand.u32 2147483647, %v888
      %vm1124 = vcmp.eq.f32.partialorder %v1123, 8.507059e+37
      %v1125 = vand.u32 %v888, 2147483648
      %v1126 = vor.u32 1.1754944e-38, %v1125
      %v1127 = vsel %vm1124, %v1126, %v1122
      %v1128 = vmul.f32 1.0, %v1127
      %v1129 = vmul.f32 %v903, %v688
      %v1130 = vmul.f32 %v918, %v690
      %v1131 = vmul.f32 %v933, %v693
      %v1132 = vmul.f32 %v948, %v695
      %v1133 = vmul.f32 %v963, %v698
      %v1134 = vmul.f32 %v978, %v700
      %v1135 = vmul.f32 %v993, %v703
      %v1136 = vmul.f32 %v1008, %v705
      %v1137 = vmul.f32 %v1023, %v708
      %v1138 = vmul.f32 %v1038, %v710
      %v1139 = vmul.f32 %v1053, %v713
      %v1140 = vmul.f32 %v1068, %v715
      %v1141 = vmul.f32 %v1083, %v718
      %v1142 = vmul.f32 %v1098, %v720
      %v1143 = vmul.f32 %v1113, %v723
      %v1144 = vmul.f32 %v1128, %v725
      %1161 = vrot.lane.b32.xlu0 %v1129, 96
      %v1162 = vpop.permute.xlu0 %1161
      %1163 = vrot.lane.b32.xlu0 %v1130, 96
      %v1164 = vpop.permute.xlu0 %1163
      %1165 = vrot.lane.b32.xlu0 %v1131, 96
      %v1166 = vpop.permute.xlu0 %1165
      %1167 = vrot.lane.b32.xlu0 %v1132, 96
      %v1168 = vpop.permute.xlu0 %1167
      %1169 = vrot.lane.b32.xlu0 %v1133, 96
      %v1170 = vpop.permute.xlu0 %1169
      %1171 = vrot.lane.b32.xlu0 %v1134, 96
      %v1172 = vpop.permute.xlu0 %1171
      %1173 = vrot.lane.b32.xlu0 %v1135, 96
      %v1174 = vpop.permute.xlu0 %1173
      %1175 = vrot.lane.b32.xlu0 %v1136, 96
      %v1176 = vpop.permute.xlu0 %1175
      %1177 = vrot.lane.b32.xlu0 %v1137, 96
      %v1178 = vpop.permute.xlu0 %1177
      %1179 = vrot.lane.b32.xlu0 %v1138, 96
      %v1180 = vpop.permute.xlu0 %1179
      %1181 = vrot.lane.b32.xlu0 %v1139, 96
      %v1182 = vpop.permute.xlu0 %1181
      %1183 = vrot.lane.b32.xlu0 %v1140, 96
      %v1184 = vpop.permute.xlu0 %1183
      %1185 = vrot.lane.b32.xlu0 %v1141, 96
      %v1186 = vpop.permute.xlu0 %1185
      %1187 = vrot.lane.b32.xlu0 %v1142, 96
      %v1188 = vpop.permute.xlu0 %1187
      %1189 = vrot.lane.b32.xlu0 %v1143, 96
      %v1190 = vpop.permute.xlu0 %1189
      %1191 = vrot.lane.b32.xlu0 %v1144, 96
      %v1192 = vpop.permute.xlu0 %1191
      %v1209 = vadd.f32 %v1129, %v1162
      %v1210 = vadd.f32 %v1130, %v1164
      %v1211 = vadd.f32 %v1131, %v1166
      %v1212 = vadd.f32 %v1132, %v1168
      %v1213 = vadd.f32 %v1133, %v1170
      %v1214 = vadd.f32 %v1134, %v1172
      %v1215 = vadd.f32 %v1135, %v1174
      %v1216 = vadd.f32 %v1136, %v1176
      %v1217 = vadd.f32 %v1137, %v1178
      %v1218 = vadd.f32 %v1138, %v1180
      %v1219 = vadd.f32 %v1139, %v1182
      %v1220 = vadd.f32 %v1140, %v1184
      %v1221 = vadd.f32 %v1141, %v1186
      %v1222 = vadd.f32 %v1142, %v1188
      %v1223 = vadd.f32 %v1143, %v1190
      %v1224 = vadd.f32 %v1144, %v1192
      %1225 = vrot.lane.b32.xlu0 %v1129, 64
      %v1226 = vpop.permute.xlu0 %1225
      %1227 = vrot.lane.b32.xlu0 %v1130, 64
      %v1228 = vpop.permute.xlu0 %1227
      %1229 = vrot.lane.b32.xlu0 %v1131, 64
      %v1230 = vpop.permute.xlu0 %1229
      %1231 = vrot.lane.b32.xlu0 %v1132, 64
      %v1232 = vpop.permute.xlu0 %1231
      %1233 = vrot.lane.b32.xlu0 %v1133, 64
      %v1234 = vpop.permute.xlu0 %1233
      %1235 = vrot.lane.b32.xlu0 %v1134, 64
      %v1236 = vpop.permute.xlu0 %1235
      %1237 = vrot.lane.b32.xlu0 %v1135, 64
      %v1238 = vpop.permute.xlu0 %1237
      %1239 = vrot.lane.b32.xlu0 %v1136, 64
      %v1240 = vpop.permute.xlu0 %1239
      %1241 = vrot.lane.b32.xlu0 %v1137, 64
      %v1242 = vpop.permute.xlu0 %1241
      %1243 = vrot.lane.b32.xlu0 %v1138, 64
      %v1244 = vpop.permute.xlu0 %1243
      %1245 = vrot.lane.b32.xlu0 %v1139, 64
      %v1246 = vpop.permute.xlu0 %1245
      %1247 = vrot.lane.b32.xlu0 %v1140, 64
      %v1248 = vpop.permute.xlu0 %1247
      %1249 = vrot.lane.b32.xlu0 %v1141, 64
      %v1250 = vpop.permute.xlu0 %1249
      %1251 = vrot.lane.b32.xlu0 %v1142, 64
      %v1252 = vpop.permute.xlu0 %1251
      %1253 = vrot.lane.b32.xlu0 %v1143, 64
      %v1254 = vpop.permute.xlu0 %1253
      %1255 = vrot.lane.b32.xlu0 %v1144, 64
      %v1256 = vpop.permute.xlu0 %1255
      %v1273 = vadd.f32 %v1209, %v1226
      %v1274 = vadd.f32 %v1210, %v1228
      %v1275 = vadd.f32 %v1211, %v1230
      %v1276 = vadd.f32 %v1212, %v1232
      %v1277 = vadd.f32 %v1213, %v1234
      %v1278 = vadd.f32 %v1214, %v1236
      %v1279 = vadd.f32 %v1215, %v1238
      %v1280 = vadd.f32 %v1216, %v1240
      %v1281 = vadd.f32 %v1217, %v1242
      %v1282 = vadd.f32 %v1218, %v1244
      %v1283 = vadd.f32 %v1219, %v1246
      %v1284 = vadd.f32 %v1220, %v1248
      %v1285 = vadd.f32 %v1221, %v1250
      %v1286 = vadd.f32 %v1222, %v1252
      %v1287 = vadd.f32 %v1223, %v1254
      %v1288 = vadd.f32 %v1224, %v1256
      %1289 = vrot.lane.b32.xlu0 %v1129, 32
      %v1290 = vpop.permute.xlu0 %1289
      %1291 = vrot.lane.b32.xlu0 %v1130, 32
      %v1292 = vpop.permute.xlu0 %1291
      %1293 = vrot.lane.b32.xlu0 %v1131, 32
      %v1294 = vpop.permute.xlu0 %1293
      %1295 = vrot.lane.b32.xlu0 %v1132, 32
      %v1296 = vpop.permute.xlu0 %1295
      %1297 = vrot.lane.b32.xlu0 %v1133, 32
      %v1298 = vpop.permute.xlu0 %1297
      %1299 = vrot.lane.b32.xlu0 %v1134, 32
      %v1300 = vpop.permute.xlu0 %1299
      %1301 = vrot.lane.b32.xlu0 %v1135, 32
      %v1302 = vpop.permute.xlu0 %1301
      %1303 = vrot.lane.b32.xlu0 %v1136, 32
      %v1304 = vpop.permute.xlu0 %1303
      %1305 = vrot.lane.b32.xlu0 %v1137, 32
      %v1306 = vpop.permute.xlu0 %1305
      %1307 = vrot.lane.b32.xlu0 %v1138, 32
      %v1308 = vpop.permute.xlu0 %1307
      %1309 = vrot.lane.b32.xlu0 %v1139, 32
      %v1310 = vpop.permute.xlu0 %1309
      %1311 = vrot.lane.b32.xlu0 %v1140, 32
      %v1312 = vpop.permute.xlu0 %1311
      %1313 = vrot.lane.b32.xlu0 %v1141, 32
      %v1314 = vpop.permute.xlu0 %1313
      %1315 = vrot.lane.b32.xlu0 %v1142, 32
      %v1316 = vpop.permute.xlu0 %1315
      %1317 = vrot.lane.b32.xlu0 %v1143, 32
      %v1318 = vpop.permute.xlu0 %1317
      %1319 = vrot.lane.b32.xlu0 %v1144, 32
      %v1320 = vpop.permute.xlu0 %1319
      %v1337 = vadd.f32 %v1273, %v1290
      %v1338 = vadd.f32 %v1274, %v1292
      %v1339 = vadd.f32 %v1275, %v1294
      %v1340 = vadd.f32 %v1276, %v1296
      %v1341 = vadd.f32 %v1277, %v1298
      %v1342 = vadd.f32 %v1278, %v1300
      %v1343 = vadd.f32 %v1279, %v1302
      %v1344 = vadd.f32 %v1280, %v1304
      %v1345 = vadd.f32 %v1281, %v1306
      %v1346 = vadd.f32 %v1282, %v1308
      %v1347 = vadd.f32 %v1283, %v1310
      %v1348 = vadd.f32 %v1284, %v1312
      %v1349 = vadd.f32 %v1285, %v1314
      %v1350 = vadd.f32 %v1286, %v1316
      %v1351 = vadd.f32 %v1287, %v1318
      %v1352 = vadd.f32 %v1288, %v1320
      %v1353 = vmul.f32 %v1337, 0.25
      %v1354 = vmul.f32 %v1338, 0.25
      %v1355 = vmul.f32 %v1339, 0.25
      %v1356 = vmul.f32 %v1340, 0.25
      %v1357 = vmul.f32 %v1341, 0.25
      %v1358 = vmul.f32 %v1342, 0.25
      %v1359 = vmul.f32 %v1343, 0.25
      %v1360 = vmul.f32 %v1344, 0.25
      %v1361 = vmul.f32 %v1345, 0.25
      %v1362 = vmul.f32 %v1346, 0.25
      %v1363 = vmul.f32 %v1347, 0.25
      %v1364 = vmul.f32 %v1348, 0.25
      %v1365 = vmul.f32 %v1349, 0.25
      %v1366 = vmul.f32 %v1350, 0.25
      %v1367 = vmul.f32 %v1351, 0.25
      %v1368 = vmul.f32 %v1352, 0.25
      %v1369 = vld [vmem:[%s326] sm:$0xff]
      %v1370 = vld [vmem:[%s326 + $0x8] sm:$0xff]
      %v1371 = vld [vmem:[%s326 + $0x10] sm:$0xff]
      %v1372 = vld [vmem:[%s326 + $0x18] sm:$0xff]
      %v1373 = vld [vmem:[%s326 + $0x20] sm:$0xff]
      %v1374 = vld [vmem:[%s326 + $0x28] sm:$0xff]
      %v1375 = vld [vmem:[%s326 + $0x30] sm:$0xff]
      %v1376 = vld [vmem:[%s326 + $0x38] sm:$0xff]
      %v1377 = vld [vmem:[%s326 + $0x40] sm:$0xff]
      %v1378 = vld [vmem:[%s326 + $0x48] sm:$0xff]
      %v1379 = vld [vmem:[%s326 + $0x50] sm:$0xff]
      %v1380 = vld [vmem:[%s326 + $0x58] sm:$0xff]
      %v1381 = vld [vmem:[%s326 + $0x60] sm:$0xff]
      %v1382 = vld [vmem:[%s326 + $0x68] sm:$0xff]
      %v1383 = vld [vmem:[%s326 + $0x70] sm:$0xff]
      %v1384 = vld [vmem:[%s326 + $0x78] sm:$0xff]
      %v1385 = vadd.f32 %v1353, %v1369
      %v1386 = vadd.f32 %v1354, %v1370
      %v1387 = vadd.f32 %v1355, %v1371
      %v1388 = vadd.f32 %v1356, %v1372
      %v1389 = vadd.f32 %v1357, %v1373
      %v1390 = vadd.f32 %v1358, %v1374
      %v1391 = vadd.f32 %v1359, %v1375
      %v1392 = vadd.f32 %v1360, %v1376
      %v1393 = vadd.f32 %v1361, %v1377
      %v1394 = vadd.f32 %v1362, %v1378
      %v1395 = vadd.f32 %v1363, %v1379
      %v1396 = vadd.f32 %v1364, %v1380
      %v1397 = vadd.f32 %v1365, %v1381
      %v1398 = vadd.f32 %v1366, %v1382
      %v1399 = vadd.f32 %v1367, %v1383
      %v1400 = vadd.f32 %v1368, %v1384
      %vm1401 = vcmask 261120
      %v1402 = vsel %vm1401, %v1385, 0.0
      %1403 = vadd.xlane.f32.xlu0 %v1402
      %v1404 = vpop.xlane.xlu0 %1403
      %v1405 = vsel %vm1401, %v1386, 0.0
      %1406 = vadd.xlane.f32.xlu0 %v1405
      %v1407 = vpop.xlane.xlu0 %1406
      %v1408 = vsel %vm1401, %v1387, 0.0
      %1409 = vadd.xlane.f32.xlu0 %v1408
      %v1410 = vpop.xlane.xlu0 %1409
      %v1411 = vsel %vm1401, %v1388, 0.0
      %1412 = vadd.xlane.f32.xlu0 %v1411
      %v1413 = vpop.xlane.xlu0 %1412
      %v1414 = vsel %vm1401, %v1389, 0.0
      %1415 = vadd.xlane.f32.xlu0 %v1414
      %v1416 = vpop.xlane.xlu0 %1415
      %v1417 = vsel %vm1401, %v1390, 0.0
      %1418 = vadd.xlane.f32.xlu0 %v1417
      %v1419 = vpop.xlane.xlu0 %1418
      %v1420 = vsel %vm1401, %v1391, 0.0
      %1421 = vadd.xlane.f32.xlu0 %v1420
      %v1422 = vpop.xlane.xlu0 %1421
      %v1423 = vsel %vm1401, %v1392, 0.0
      %1424 = vadd.xlane.f32.xlu0 %v1423
      %v1425 = vpop.xlane.xlu0 %1424
      %v1426 = vsel %vm1401, %v1393, 0.0
      %1427 = vadd.xlane.f32.xlu0 %v1426
      %v1428 = vpop.xlane.xlu0 %1427
      %v1429 = vsel %vm1401, %v1394, 0.0
      %1430 = vadd.xlane.f32.xlu0 %v1429
      %v1431 = vpop.xlane.xlu0 %1430
      %v1432 = vsel %vm1401, %v1395, 0.0
      %1433 = vadd.xlane.f32.xlu0 %v1432
      %v1434 = vpop.xlane.xlu0 %1433
      %v1435 = vsel %vm1401, %v1396, 0.0
      %1436 = vadd.xlane.f32.xlu0 %v1435
      %v1437 = vpop.xlane.xlu0 %1436
      %v1438 = vsel %vm1401, %v1397, 0.0
      %1439 = vadd.xlane.f32.xlu0 %v1438
      %v1440 = vpop.xlane.xlu0 %1439
      %v1441 = vsel %vm1401, %v1398, 0.0
      %1442 = vadd.xlane.f32.xlu0 %v1441
      %v1443 = vpop.xlane.xlu0 %1442
      %v1444 = vsel %vm1401, %v1399, 0.0
      %1445 = vadd.xlane.f32.xlu0 %v1444
      %v1446 = vpop.xlane.xlu0 %1445
      %v1447 = vsel %vm1401, %v1400, 0.0
      %1448 = vadd.xlane.f32.xlu0 %v1447
      %v1449 = vpop.xlane.xlu0 %1448
      %v1450 = vrcp.pop 32.0
      %v1451 = vmul.f32 32.0, %v1450
      %v1452 = vsub.f32 1.0, %v1451
      %v1453 = vmul.f32 %v1450, %v1452
      %v1454 = vadd.f32 %v1450, %v1453
      %vm1455 = vweird.f32 %v1450
      %v1456 = vsel %vm1455, %v1450, %v1454
      %v1457 = vmul.f32 %v1404, %v1456
      %v1458 = vmul.f32 %v1407, %v1456
      %v1459 = vmul.f32 %v1410, %v1456
      %v1460 = vmul.f32 %v1413, %v1456
      %v1461 = vmul.f32 %v1416, %v1456
      %v1462 = vmul.f32 %v1419, %v1456
      %v1463 = vmul.f32 %v1422, %v1456
      %v1464 = vmul.f32 %v1425, %v1456
      %v1465 = vmul.f32 %v1428, %v1456
      %v1466 = vmul.f32 %v1431, %v1456
      %v1467 = vmul.f32 %v1434, %v1456
      %v1468 = vmul.f32 %v1437, %v1456
      %v1469 = vmul.f32 %v1440, %v1456
      %v1470 = vmul.f32 %v1443, %v1456
      %v1471 = vmul.f32 %v1446, %v1456
      %v1472 = vmul.f32 %v1449, %v1456
      %v1473 = vsub.f32 %v1385, %v1457
      %v1474 = vsub.f32 %v1386, %v1458
      %v1475 = vsub.f32 %v1387, %v1459
      %v1476 = vsub.f32 %v1388, %v1460
      %v1477 = vsub.f32 %v1389, %v1461
      %v1478 = vsub.f32 %v1390, %v1462
      %v1479 = vsub.f32 %v1391, %v1463
      %v1480 = vsub.f32 %v1392, %v1464
      %v1481 = vsub.f32 %v1393, %v1465
      %v1482 = vsub.f32 %v1394, %v1466
      %v1483 = vsub.f32 %v1395, %v1467
      %v1484 = vsub.f32 %v1396, %v1468
      %v1485 = vsub.f32 %v1397, %v1469
      %v1486 = vsub.f32 %v1398, %v1470
      %v1487 = vsub.f32 %v1399, %v1471
      %v1488 = vsub.f32 %v1400, %v1472
      %v1489 = vmul.f32 %v1473, %v1473
      %v1490 = vmul.f32 %v1474, %v1474
      %v1491 = vmul.f32 %v1475, %v1475
      %v1492 = vmul.f32 %v1476, %v1476
      %v1493 = vmul.f32 %v1477, %v1477
      %v1494 = vmul.f32 %v1478, %v1478
      %v1495 = vmul.f32 %v1479, %v1479
      %v1496 = vmul.f32 %v1480, %v1480
      %v1497 = vmul.f32 %v1481, %v1481
      %v1498 = vmul.f32 %v1482, %v1482
      %v1499 = vmul.f32 %v1483, %v1483
      %v1500 = vmul.f32 %v1484, %v1484
      %v1501 = vmul.f32 %v1485, %v1485
      %v1502 = vmul.f32 %v1486, %v1486
      %v1503 = vmul.f32 %v1487, %v1487
      %v1504 = vmul.f32 %v1488, %v1488
      %v1505 = vsel %vm1401, %v1489, 0.0
      %1506 = vadd.xlane.f32.xlu0 %v1505
      %v1507 = vpop.xlane.xlu0 %1506
      %v1508 = vsel %vm1401, %v1490, 0.0
      %1509 = vadd.xlane.f32.xlu0 %v1508
      %v1510 = vpop.xlane.xlu0 %1509
      %v1511 = vsel %vm1401, %v1491, 0.0
      %1512 = vadd.xlane.f32.xlu0 %v1511
      %v1513 = vpop.xlane.xlu0 %1512
      %v1514 = vsel %vm1401, %v1492, 0.0
      %1515 = vadd.xlane.f32.xlu0 %v1514
      %v1516 = vpop.xlane.xlu0 %1515
      %v1517 = vsel %vm1401, %v1493, 0.0
      %1518 = vadd.xlane.f32.xlu0 %v1517
      %v1519 = vpop.xlane.xlu0 %1518
      %v1520 = vsel %vm1401, %v1494, 0.0
      %1521 = vadd.xlane.f32.xlu0 %v1520
      %v1522 = vpop.xlane.xlu0 %1521
      %v1523 = vsel %vm1401, %v1495, 0.0
      %1524 = vadd.xlane.f32.xlu0 %v1523
      %v1525 = vpop.xlane.xlu0 %1524
      %v1526 = vsel %vm1401, %v1496, 0.0
      %1527 = vadd.xlane.f32.xlu0 %v1526
      %v1528 = vpop.xlane.xlu0 %1527
      %v1529 = vsel %vm1401, %v1497, 0.0
      %1530 = vadd.xlane.f32.xlu0 %v1529
      %v1531 = vpop.xlane.xlu0 %1530
      %v1532 = vsel %vm1401, %v1498, 0.0
      %1533 = vadd.xlane.f32.xlu0 %v1532
      %v1534 = vpop.xlane.xlu0 %1533
      %v1535 = vsel %vm1401, %v1499, 0.0
      %1536 = vadd.xlane.f32.xlu0 %v1535
      %v1537 = vpop.xlane.xlu0 %1536
      %v1538 = vsel %vm1401, %v1500, 0.0
      %1539 = vadd.xlane.f32.xlu0 %v1538
      %v1540 = vpop.xlane.xlu0 %1539
      %v1541 = vsel %vm1401, %v1501, 0.0
      %1542 = vadd.xlane.f32.xlu0 %v1541
      %v1543 = vpop.xlane.xlu0 %1542
      %v1544 = vsel %vm1401, %v1502, 0.0
      %1545 = vadd.xlane.f32.xlu0 %v1544
      %v1546 = vpop.xlane.xlu0 %1545
      %v1547 = vsel %vm1401, %v1503, 0.0
      %1548 = vadd.xlane.f32.xlu0 %v1547
      %v1549 = vpop.xlane.xlu0 %1548
      %v1550 = vsel %vm1401, %v1504, 0.0
      %1551 = vadd.xlane.f32.xlu0 %v1550
      %v1552 = vpop.xlane.xlu0 %1551
      %v1553 = vmul.f32 %v1507, %v1456
      %v1554 = vmul.f32 %v1510, %v1456
      %v1555 = vmul.f32 %v1513, %v1456
      %v1556 = vmul.f32 %v1516, %v1456
      %v1557 = vmul.f32 %v1519, %v1456
      %v1558 = vmul.f32 %v1522, %v1456
      %v1559 = vmul.f32 %v1525, %v1456
      %v1560 = vmul.f32 %v1528, %v1456
      %v1561 = vmul.f32 %v1531, %v1456
      %v1562 = vmul.f32 %v1534, %v1456
      %v1563 = vmul.f32 %v1537, %v1456
      %v1564 = vmul.f32 %v1540, %v1456
      %v1565 = vmul.f32 %v1543, %v1456
      %v1566 = vmul.f32 %v1546, %v1456
      %v1567 = vmul.f32 %v1549, %v1456
      %v1568 = vmul.f32 %v1552, %v1456
      %v1569 = vadd.f32 %v1553, 1e-05
      %v1570 = vadd.f32 %v1554, 1e-05
      %v1571 = vadd.f32 %v1555, 1e-05
      %v1572 = vadd.f32 %v1556, 1e-05
      %v1573 = vadd.f32 %v1557, 1e-05
      %v1574 = vadd.f32 %v1558, 1e-05
      %v1575 = vadd.f32 %v1559, 1e-05
      %v1576 = vadd.f32 %v1560, 1e-05
      %v1577 = vadd.f32 %v1561, 1e-05
      %v1578 = vadd.f32 %v1562, 1e-05
      %v1579 = vadd.f32 %v1563, 1e-05
      %v1580 = vadd.f32 %v1564, 1e-05
      %v1581 = vadd.f32 %v1565, 1e-05
      %v1582 = vadd.f32 %v1566, 1e-05
      %v1583 = vadd.f32 %v1567, 1e-05
      %v1584 = vadd.f32 %v1568, 1e-05
      %v1585 = vrsqrt.pop %v1569
      %v1586 = vmul.f32 %v1585, %v1569
      %v1587 = vmul.f32 %v1586, %v1585
      %v1588 = vmul.f32 0.5, %v1587
      %v1589 = vsub.f32 1.5, %v1588
      %v1590 = vmul.f32 %v1585, %v1589
      %vm1591 = vweird.f32 %v1569
      %vm1592 = vweird.f32 %v1585
      %vm1593 = vmor %vm1591, %vm1592
      %v1594 = vsel %vm1593, %v1585, %v1590
      %v1595 = vrsqrt.pop %v1570
      %v1596 = vmul.f32 %v1595, %v1570
      %v1597 = vmul.f32 %v1596, %v1595
      %v1598 = vmul.f32 0.5, %v1597
      %v1599 = vsub.f32 1.5, %v1598
      %v1600 = vmul.f32 %v1595, %v1599
      %vm1601 = vweird.f32 %v1570
      %vm1602 = vweird.f32 %v1595
      %vm1603 = vmor %vm1601, %vm1602
      %v1604 = vsel %vm1603, %v1595, %v1600
      %v1605 = vrsqrt.pop %v1571
      %v1606 = vmul.f32 %v1605, %v1571
      %v1607 = vmul.f32 %v1606, %v1605
      %v1608 = vmul.f32 0.5, %v1607
      %v1609 = vsub.f32 1.5, %v1608
      %v1610 = vmul.f32 %v1605, %v1609
      %vm1611 = vweird.f32 %v1571
      %vm1612 = vweird.f32 %v1605
      %vm1613 = vmor %vm1611, %vm1612
      %v1614 = vsel %vm1613, %v1605, %v1610
      %v1615 = vrsqrt.pop %v1572
      %v1616 = vmul.f32 %v1615, %v1572
      %v1617 = vmul.f32 %v1616, %v1615
      %v1618 = vmul.f32 0.5, %v1617
      %v1619 = vsub.f32 1.5, %v1618
      %v1620 = vmul.f32 %v1615, %v1619
      %vm1621 = vweird.f32 %v1572
      %vm1622 = vweird.f32 %v1615
      %vm1623 = vmor %vm1621, %vm1622
      %v1624 = vsel %vm1623, %v1615, %v1620
      %v1625 = vrsqrt.pop %v1573
      %v1626 = vmul.f32 %v1625, %v1573
      %v1627 = vmul.f32 %v1626, %v1625
      %v1628 = vmul.f32 0.5, %v1627
      %v1629 = vsub.f32 1.5, %v1628
      %v1630 = vmul.f32 %v1625, %v1629
      %vm1631 = vweird.f32 %v1573
      %vm1632 = vweird.f32 %v1625
      %vm1633 = vmor %vm1631, %vm1632
      %v1634 = vsel %vm1633, %v1625, %v1630
      %v1635 = vrsqrt.pop %v1574
      %v1636 = vmul.f32 %v1635, %v1574
      %v1637 = vmul.f32 %v1636, %v1635
      %v1638 = vmul.f32 0.5, %v1637
      %v1639 = vsub.f32 1.5, %v1638
      %v1640 = vmul.f32 %v1635, %v1639
      %vm1641 = vweird.f32 %v1574
      %vm1642 = vweird.f32 %v1635
      %vm1643 = vmor %vm1641, %vm1642
      %v1644 = vsel %vm1643, %v1635, %v1640
      %v1645 = vrsqrt.pop %v1575
      %v1646 = vmul.f32 %v1645, %v1575
      %v1647 = vmul.f32 %v1646, %v1645
      %v1648 = vmul.f32 0.5, %v1647
      %v1649 = vsub.f32 1.5, %v1648
      %v1650 = vmul.f32 %v1645, %v1649
      %vm1651 = vweird.f32 %v1575
      %vm1652 = vweird.f32 %v1645
      %vm1653 = vmor %vm1651, %vm1652
      %v1654 = vsel %vm1653, %v1645, %v1650
      %v1655 = vrsqrt.pop %v1576
      %v1656 = vmul.f32 %v1655, %v1576
      %v1657 = vmul.f32 %v1656, %v1655
      %v1658 = vmul.f32 0.5, %v1657
      %v1659 = vsub.f32 1.5, %v1658
      %v1660 = vmul.f32 %v1655, %v1659
      %vm1661 = vweird.f32 %v1576
      %vm1662 = vweird.f32 %v1655
      %vm1663 = vmor %vm1661, %vm1662
      %v1664 = vsel %vm1663, %v1655, %v1660
      %v1665 = vrsqrt.pop %v1577
      %v1666 = vmul.f32 %v1665, %v1577
      %v1667 = vmul.f32 %v1666, %v1665
      %v1668 = vmul.f32 0.5, %v1667
      %v1669 = vsub.f32 1.5, %v1668
      %v1670 = vmul.f32 %v1665, %v1669
      %vm1671 = vweird.f32 %v1577
      %vm1672 = vweird.f32 %v1665
      %vm1673 = vmor %vm1671, %vm1672
      %v1674 = vsel %vm1673, %v1665, %v1670
      %v1675 = vrsqrt.pop %v1578
      %v1676 = vmul.f32 %v1675, %v1578
      %v1677 = vmul.f32 %v1676, %v1675
      %v1678 = vmul.f32 0.5, %v1677
      %v1679 = vsub.f32 1.5, %v1678
      %v1680 = vmul.f32 %v1675, %v1679
      %vm1681 = vweird.f32 %v1578
      %vm1682 = vweird.f32 %v1675
      %vm1683 = vmor %vm1681, %vm1682
      %v1684 = vsel %vm1683, %v1675, %v1680
      %v1685 = vrsqrt.pop %v1579
      %v1686 = vmul.f32 %v1685, %v1579
      %v1687 = vmul.f32 %v1686, %v1685
      %v1688 = vmul.f32 0.5, %v1687
      %v1689 = vsub.f32 1.5, %v1688
      %v1690 = vmul.f32 %v1685, %v1689
      %vm1691 = vweird.f32 %v1579
      %vm1692 = vweird.f32 %v1685
      %vm1693 = vmor %vm1691, %vm1692
      %v1694 = vsel %vm1693, %v1685, %v1690
      %v1695 = vrsqrt.pop %v1580
      %v1696 = vmul.f32 %v1695, %v1580
      %v1697 = vmul.f32 %v1696, %v1695
      %v1698 = vmul.f32 0.5, %v1697
      %v1699 = vsub.f32 1.5, %v1698
      %v1700 = vmul.f32 %v1695, %v1699
      %vm1701 = vweird.f32 %v1580
      %vm1702 = vweird.f32 %v1695
      %vm1703 = vmor %vm1701, %vm1702
      %v1704 = vsel %vm1703, %v1695, %v1700
      %v1705 = vrsqrt.pop %v1581
      %v1706 = vmul.f32 %v1705, %v1581
      %v1707 = vmul.f32 %v1706, %v1705
      %v1708 = vmul.f32 0.5, %v1707
      %v1709 = vsub.f32 1.5, %v1708
      %v1710 = vmul.f32 %v1705, %v1709
      %vm1711 = vweird.f32 %v1581
      %vm1712 = vweird.f32 %v1705
      %vm1713 = vmor %vm1711, %vm1712
      %v1714 = vsel %vm1713, %v1705, %v1710
      %v1715 = vrsqrt.pop %v1582
      %v1716 = vmul.f32 %v1715, %v1582
      %v1717 = vmul.f32 %v1716, %v1715
      %v1718 = vmul.f32 0.5, %v1717
      %v1719 = vsub.f32 1.5, %v1718
      %v1720 = vmul.f32 %v1715, %v1719
      %vm1721 = vweird.f32 %v1582
      %vm1722 = vweird.f32 %v1715
      %vm1723 = vmor %vm1721, %vm1722
      %v1724 = vsel %vm1723, %v1715, %v1720
      %v1725 = vrsqrt.pop %v1583
      %v1726 = vmul.f32 %v1725, %v1583
      %v1727 = vmul.f32 %v1726, %v1725
      %v1728 = vmul.f32 0.5, %v1727
      %v1729 = vsub.f32 1.5, %v1728
      %v1730 = vmul.f32 %v1725, %v1729
      %vm1731 = vweird.f32 %v1583
      %vm1732 = vweird.f32 %v1725
      %vm1733 = vmor %vm1731, %vm1732
      %v1734 = vsel %vm1733, %v1725, %v1730
      %v1735 = vrsqrt.pop %v1584
      %v1736 = vmul.f32 %v1735, %v1584
      %v1737 = vmul.f32 %v1736, %v1735
      %v1738 = vmul.f32 0.5, %v1737
      %v1739 = vsub.f32 1.5, %v1738
      %v1740 = vmul.f32 %v1735, %v1739
      %vm1741 = vweird.f32 %v1584
      %vm1742 = vweird.f32 %v1735
      %vm1743 = vmor %vm1741, %vm1742
      %v1744 = vsel %vm1743, %v1735, %v1740
      %v1745 = vmul.f32 %v1473, %v1594
      %v1746 = vmul.f32 %v1474, %v1604
      %v1747 = vmul.f32 %v1475, %v1614
      %v1748 = vmul.f32 %v1476, %v1624
      %v1749 = vmul.f32 %v1477, %v1634
      %v1750 = vmul.f32 %v1478, %v1644
      %v1751 = vmul.f32 %v1479, %v1654
      %v1752 = vmul.f32 %v1480, %v1664
      %v1753 = vmul.f32 %v1481, %v1674
      %v1754 = vmul.f32 %v1482, %v1684
      %v1755 = vmul.f32 %v1483, %v1694
      %v1756 = vmul.f32 %v1484, %v1704
      %v1757 = vmul.f32 %v1485, %v1714
      %v1758 = vmul.f32 %v1486, %v1724
      %v1759 = vmul.f32 %v1487, %v1734
      %v1760 = vmul.f32 %v1488, %v1744
      %v1761 = vpack.c.bf16 %v1746, %v1745
      %v1762 = vpack.c.bf16 %v1748, %v1747
      %v1763 = vpack.c.bf16 %v1750, %v1749
      %v1764 = vpack.c.bf16 %v1752, %v1751
      %v1765 = vpack.c.bf16 %v1754, %v1753
      %v1766 = vpack.c.bf16 %v1756, %v1755
      %v1767 = vpack.c.bf16 %v1758, %v1757
      %v1768 = vpack.c.bf16 %v1760, %v1759
      %v1769 = vld [vmem:[%s4] sm:$0xf]
      %v1770 = vld [vmem:[%s4 + $0x4] sm:$0xf]
      %v1771 = vld [vmem:[%s4 + $0x8] sm:$0xf]
      %v1772 = vld [vmem:[%s4 + $0xc] sm:$0xf]
      %v1773 = vld [vmem:[%s5] sm:$0x1]
      %v1775 = vperm.slane %v1773, 0
      %v1781 = vunpack.c.l.b16 %v1769
      %v1782 = vunpack.c.l.b16 %v1770
      %v1783 = vunpack.c.l.b16 %v1771
      %v1784 = vunpack.c.l.b16 %v1772
      %v1785 = vpack.c.b16 %v1782, %v1781
      %v1786 = vpack.c.b16 %v1784, %v1783
      %v1790 = vsel %vm1401, %v1761, 0
      %v1793 = vsel %vm1401, %v1762, 0
      %v1796 = vsel %vm1401, %v1763, 0
      %v1799 = vsel %vm1401, %v1764, 0
      %v1802 = vsel %vm1401, %v1765, 0
      %v1805 = vsel %vm1401, %v1766, 0
      %v1808 = vsel %vm1401, %v1767, 0
      %v1811 = vsel %vm1401, %v1768, 0
      %1813 = vmatpush.bf16.msra.mxu0 0
      %1814 = vmatpush.bf16.msra.mxu0 0
      %1815 = vmatpush.bf16.msra.mxu0 0
      %1816 = vmatpush.bf16.msra.mxu0 0
      %1817 = vmatpush.bf16.msra.mxu0 0
      %1818 = vmatpush.bf16.msra.mxu0 0
      %1819 = vmatpush.bf16.msra.mxu0 %v1786
      %1820 = vmatpush.bf16.msra.mxu0 %v1785
      %1821 = vmatmul.bf16.gmra.mxu0 %v1790
      %v1822 = vpop.f32.mrf.mxu0
      %v1823 = vadd.f32 %v1775, %v1822
      %v1824 = vpop.f32.mrf.mxu0
      %v1825 = vadd.f32 %v1775, %v1824
      %1826 = vmatmul.bf16.gmra.mxu0 %v1793
      %v1827 = vpop.f32.mrf.mxu0
      %v1828 = vadd.f32 %v1775, %v1827
      %v1829 = vpop.f32.mrf.mxu0
      %v1830 = vadd.f32 %v1775, %v1829
      %1831 = vmatmul.bf16.gmra.mxu0 %v1796
      %v1832 = vpop.f32.mrf.mxu0
      %v1833 = vadd.f32 %v1775, %v1832
      %v1834 = vpop.f32.mrf.mxu0
      %v1835 = vadd.f32 %v1775, %v1834
      %1836 = vmatmul.bf16.gmra.mxu0 %v1799
      %v1837 = vpop.f32.mrf.mxu0
      %v1838 = vadd.f32 %v1775, %v1837
      %v1839 = vpop.f32.mrf.mxu0
      %v1840 = vadd.f32 %v1775, %v1839
      %1841 = vmatmul.bf16.gmra.mxu0 %v1802
      %v1842 = vpop.f32.mrf.mxu0
      %v1843 = vadd.f32 %v1775, %v1842
      %v1844 = vpop.f32.mrf.mxu0
      %v1845 = vadd.f32 %v1775, %v1844
      %1846 = vmatmul.bf16.gmra.mxu0 %v1805
      %v1847 = vpop.f32.mrf.mxu0
      %v1848 = vadd.f32 %v1775, %v1847
      %v1849 = vpop.f32.mrf.mxu0
      %v1850 = vadd.f32 %v1775, %v1849
      %1851 = vmatmul.bf16.gmra.mxu0 %v1808
      %v1852 = vpop.f32.mrf.mxu0
      %v1853 = vadd.f32 %v1775, %v1852
      %v1854 = vpop.f32.mrf.mxu0
      %v1855 = vadd.f32 %v1775, %v1854
      %1856 = vmatmul.bf16.gmra.mxu0 %v1811
      %v1857 = vpop.f32.mrf.mxu0
      %v1858 = vadd.f32 %v1775, %v1857
      %v1859 = vpop.f32.mrf.mxu0
      %v1860 = vadd.f32 %v1775, %v1859
      %1861 = vdwg.mxu0
      %v1862 = vmax.f32 %v1823, 0.0
      %v1863 = vmax.f32 %v1825, 0.0
      %v1864 = vmax.f32 %v1828, 0.0
      %v1865 = vmax.f32 %v1830, 0.0
      %v1866 = vmax.f32 %v1833, 0.0
      %v1867 = vmax.f32 %v1835, 0.0
      %v1868 = vmax.f32 %v1838, 0.0
      %v1869 = vmax.f32 %v1840, 0.0
      %v1870 = vmax.f32 %v1843, 0.0
      %v1871 = vmax.f32 %v1845, 0.0
      %v1872 = vmax.f32 %v1848, 0.0
      %v1873 = vmax.f32 %v1850, 0.0
      %v1874 = vmax.f32 %v1853, 0.0
      %v1875 = vmax.f32 %v1855, 0.0
      %v1876 = vmax.f32 %v1858, 0.0
      %v1877 = vmax.f32 %v1860, 0.0
      %v1878 = vpack.c.bf16 %v1863, %v1862
      %v1879 = vpack.c.bf16 %v1865, %v1864
      %v1880 = vpack.c.bf16 %v1867, %v1866
      %v1881 = vpack.c.bf16 %v1869, %v1868
      %v1882 = vpack.c.bf16 %v1871, %v1870
      %v1883 = vpack.c.bf16 %v1873, %v1872
      %v1884 = vpack.c.bf16 %v1875, %v1874
      %v1885 = vpack.c.bf16 %v1877, %v1876
      %v1886 = vld [vmem:[%s6] sm:$0xf]
      %v1887 = vld [vmem:[%s6 + $0x4] sm:$0xf]
      %v1888 = vld [vmem:[%s6 + $0x8] sm:$0xf]
      %v1889 = vld [vmem:[%s6 + $0xc] sm:$0xf]
      %v1890 = vld [vmem:[%s7] sm:$0x1]
      %v1892 = vperm.slane %v1890, 0
      %v1898 = vunpack.c.l.b16 %v1886
      %v1899 = vunpack.c.l.b16 %v1887
      %v1900 = vunpack.c.l.b16 %v1888
      %v1901 = vunpack.c.l.b16 %v1889
      %v1902 = vpack.c.b16 %v1899, %v1898
      %v1903 = vpack.c.b16 %v1901, %v1900
      %v1907 = vsel %vm1401, %v1878, 0
      %v1910 = vsel %vm1401, %v1879, 0
      %v1913 = vsel %vm1401, %v1880, 0
      %v1916 = vsel %vm1401, %v1881, 0
      %v1919 = vsel %vm1401, %v1882, 0
      %v1922 = vsel %vm1401, %v1883, 0
      %v1925 = vsel %vm1401, %v1884, 0
      %v1928 = vsel %vm1401, %v1885, 0
      %1930 = vmatpush.bf16.msra.mxu0 0
      %1931 = vmatpush.bf16.msra.mxu0 0
      %1932 = vmatpush.bf16.msra.mxu0 0
      %1933 = vmatpush.bf16.msra.mxu0 0
      %1934 = vmatpush.bf16.msra.mxu0 0
      %1935 = vmatpush.bf16.msra.mxu0 0
      %1936 = vmatpush.bf16.msra.mxu0 %v1903
      %1937 = vmatpush.bf16.msra.mxu0 %v1902
      %1938 = vmatmul.bf16.gmra.mxu0 %v1907
      %v1939 = vpop.f32.mrf.mxu0
      %v1940 = vadd.f32 %v1892, %v1939
      %v1941 = vpop.f32.mrf.mxu0
      %v1942 = vadd.f32 %v1892, %v1941
      %1943 = vmatmul.bf16.gmra.mxu0 %v1910
      %v1944 = vpop.f32.mrf.mxu0
      %v1945 = vadd.f32 %v1892, %v1944
      %v1946 = vpop.f32.mrf.mxu0
      %v1947 = vadd.f32 %v1892, %v1946
      %1948 = vmatmul.bf16.gmra.mxu0 %v1913
      %v1949 = vpop.f32.mrf.mxu0
      %v1950 = vadd.f32 %v1892, %v1949
      %v1951 = vpop.f32.mrf.mxu0
      %v1952 = vadd.f32 %v1892, %v1951
      %1953 = vmatmul.bf16.gmra.mxu0 %v1916
      %v1954 = vpop.f32.mrf.mxu0
      %v1955 = vadd.f32 %v1892, %v1954
      %v1956 = vpop.f32.mrf.mxu0
      %v1957 = vadd.f32 %v1892, %v1956
      %1958 = vmatmul.bf16.gmra.mxu0 %v1919
      %v1959 = vpop.f32.mrf.mxu0
      %v1960 = vadd.f32 %v1892, %v1959
      %v1961 = vpop.f32.mrf.mxu0
      %v1962 = vadd.f32 %v1892, %v1961
      %1963 = vmatmul.bf16.gmra.mxu0 %v1922
      %v1964 = vpop.f32.mrf.mxu0
      %v1965 = vadd.f32 %v1892, %v1964
      %v1966 = vpop.f32.mrf.mxu0
      %v1967 = vadd.f32 %v1892, %v1966
      %1968 = vmatmul.bf16.gmra.mxu0 %v1925
      %v1969 = vpop.f32.mrf.mxu0
      %v1970 = vadd.f32 %v1892, %v1969
      %v1971 = vpop.f32.mrf.mxu0
      %v1972 = vadd.f32 %v1892, %v1971
      %1973 = vmatmul.bf16.gmra.mxu0 %v1928
      %v1974 = vpop.f32.mrf.mxu0
      %v1975 = vadd.f32 %v1892, %v1974
      %v1976 = vpop.f32.mrf.mxu0
      %v1977 = vadd.f32 %v1892, %v1976
      %1978 = vdwg.mxu0
      %v1979 = vadd.f32 %v1940, %v1745
      %v1980 = vadd.f32 %v1942, %v1746
      %v1981 = vadd.f32 %v1945, %v1747
      %v1982 = vadd.f32 %v1947, %v1748
      %v1983 = vadd.f32 %v1950, %v1749
      %v1984 = vadd.f32 %v1952, %v1750
      %v1985 = vadd.f32 %v1955, %v1751
      %v1986 = vadd.f32 %v1957, %v1752
      %v1987 = vadd.f32 %v1960, %v1753
      %v1988 = vadd.f32 %v1962, %v1754
      %v1989 = vadd.f32 %v1965, %v1755
      %v1990 = vadd.f32 %v1967, %v1756
      %v1991 = vadd.f32 %v1970, %v1757
      %v1992 = vadd.f32 %v1972, %v1758
      %v1993 = vadd.f32 %v1975, %v1759
      %v1994 = vadd.f32 %v1977, %v1760
      %v1995 = vsel %vm1401, %v1979, 0.0
      %1996 = vadd.xlane.f32.xlu0 %v1995
      %v1997 = vpop.xlane.xlu0 %1996
      %v1998 = vsel %vm1401, %v1980, 0.0
      %1999 = vadd.xlane.f32.xlu0 %v1998
      %v2000 = vpop.xlane.xlu0 %1999
      %v2001 = vsel %vm1401, %v1981, 0.0
      %2002 = vadd.xlane.f32.xlu0 %v2001
      %v2003 = vpop.xlane.xlu0 %2002
      %v2004 = vsel %vm1401, %v1982, 0.0
      %2005 = vadd.xlane.f32.xlu0 %v2004
      %v2006 = vpop.xlane.xlu0 %2005
      %v2007 = vsel %vm1401, %v1983, 0.0
      %2008 = vadd.xlane.f32.xlu0 %v2007
      %v2009 = vpop.xlane.xlu0 %2008
      %v2010 = vsel %vm1401, %v1984, 0.0
      %2011 = vadd.xlane.f32.xlu0 %v2010
      %v2012 = vpop.xlane.xlu0 %2011
      %v2013 = vsel %vm1401, %v1985, 0.0
      %2014 = vadd.xlane.f32.xlu0 %v2013
      %v2015 = vpop.xlane.xlu0 %2014
      %v2016 = vsel %vm1401, %v1986, 0.0
      %2017 = vadd.xlane.f32.xlu0 %v2016
      %v2018 = vpop.xlane.xlu0 %2017
      %v2019 = vsel %vm1401, %v1987, 0.0
      %2020 = vadd.xlane.f32.xlu0 %v2019
      %v2021 = vpop.xlane.xlu0 %2020
      %v2022 = vsel %vm1401, %v1988, 0.0
      %2023 = vadd.xlane.f32.xlu0 %v2022
      %v2024 = vpop.xlane.xlu0 %2023
      %v2025 = vsel %vm1401, %v1989, 0.0
      %2026 = vadd.xlane.f32.xlu0 %v2025
      %v2027 = vpop.xlane.xlu0 %2026
      %v2028 = vsel %vm1401, %v1990, 0.0
      %2029 = vadd.xlane.f32.xlu0 %v2028
      %v2030 = vpop.xlane.xlu0 %2029
      %v2031 = vsel %vm1401, %v1991, 0.0
      %2032 = vadd.xlane.f32.xlu0 %v2031
      %v2033 = vpop.xlane.xlu0 %2032
      %v2034 = vsel %vm1401, %v1992, 0.0
      %2035 = vadd.xlane.f32.xlu0 %v2034
      %v2036 = vpop.xlane.xlu0 %2035
      %v2037 = vsel %vm1401, %v1993, 0.0
      %2038 = vadd.xlane.f32.xlu0 %v2037
      %v2039 = vpop.xlane.xlu0 %2038
      %v2040 = vsel %vm1401, %v1994, 0.0
      %2041 = vadd.xlane.f32.xlu0 %v2040
      %v2042 = vpop.xlane.xlu0 %2041
      %v2043 = vmul.f32 %v1997, %v1456
      %v2044 = vmul.f32 %v2000, %v1456
      %v2045 = vmul.f32 %v2003, %v1456
      %v2046 = vmul.f32 %v2006, %v1456
      %v2047 = vmul.f32 %v2009, %v1456
      %v2048 = vmul.f32 %v2012, %v1456
      %v2049 = vmul.f32 %v2015, %v1456
      %v2050 = vmul.f32 %v2018, %v1456
      %v2051 = vmul.f32 %v2021, %v1456
      %v2052 = vmul.f32 %v2024, %v1456
      %v2053 = vmul.f32 %v2027, %v1456
      %v2054 = vmul.f32 %v2030, %v1456
      %v2055 = vmul.f32 %v2033, %v1456
      %v2056 = vmul.f32 %v2036, %v1456
      %v2057 = vmul.f32 %v2039, %v1456
      %v2058 = vmul.f32 %v2042, %v1456
      %v2059 = vsub.f32 %v1979, %v2043
      %v2060 = vsub.f32 %v1980, %v2044
      %v2061 = vsub.f32 %v1981, %v2045
      %v2062 = vsub.f32 %v1982, %v2046
      %v2063 = vsub.f32 %v1983, %v2047
      %v2064 = vsub.f32 %v1984, %v2048
      %v2065 = vsub.f32 %v1985, %v2049
      %v2066 = vsub.f32 %v1986, %v2050
      %v2067 = vsub.f32 %v1987, %v2051
      %v2068 = vsub.f32 %v1988, %v2052
      %v2069 = vsub.f32 %v1989, %v2053
      %v2070 = vsub.f32 %v1990, %v2054
      %v2071 = vsub.f32 %v1991, %v2055
      %v2072 = vsub.f32 %v1992, %v2056
      %v2073 = vsub.f32 %v1993, %v2057
      %v2074 = vsub.f32 %v1994, %v2058
      %v2075 = vmul.f32 %v2059, %v2059
      %v2076 = vmul.f32 %v2060, %v2060
      %v2077 = vmul.f32 %v2061, %v2061
      %v2078 = vmul.f32 %v2062, %v2062
      %v2079 = vmul.f32 %v2063, %v2063
      %v2080 = vmul.f32 %v2064, %v2064
      %v2081 = vmul.f32 %v2065, %v2065
      %v2082 = vmul.f32 %v2066, %v2066
      %v2083 = vmul.f32 %v2067, %v2067
      %v2084 = vmul.f32 %v2068, %v2068
      %v2085 = vmul.f32 %v2069, %v2069
      %v2086 = vmul.f32 %v2070, %v2070
      %v2087 = vmul.f32 %v2071, %v2071
      %v2088 = vmul.f32 %v2072, %v2072
      %v2089 = vmul.f32 %v2073, %v2073
      %v2090 = vmul.f32 %v2074, %v2074
      %v2091 = vsel %vm1401, %v2075, 0.0
      %2092 = vadd.xlane.f32.xlu0 %v2091
      %v2093 = vpop.xlane.xlu0 %2092
      %v2094 = vsel %vm1401, %v2076, 0.0
      %2095 = vadd.xlane.f32.xlu0 %v2094
      %v2096 = vpop.xlane.xlu0 %2095
      %v2097 = vsel %vm1401, %v2077, 0.0
      %2098 = vadd.xlane.f32.xlu0 %v2097
      %v2099 = vpop.xlane.xlu0 %2098
      %v2100 = vsel %vm1401, %v2078, 0.0
      %2101 = vadd.xlane.f32.xlu0 %v2100
      %v2102 = vpop.xlane.xlu0 %2101
      %v2103 = vsel %vm1401, %v2079, 0.0
      %2104 = vadd.xlane.f32.xlu0 %v2103
      %v2105 = vpop.xlane.xlu0 %2104
      %v2106 = vsel %vm1401, %v2080, 0.0
      %2107 = vadd.xlane.f32.xlu0 %v2106
      %v2108 = vpop.xlane.xlu0 %2107
      %v2109 = vsel %vm1401, %v2081, 0.0
      %2110 = vadd.xlane.f32.xlu0 %v2109
      %v2111 = vpop.xlane.xlu0 %2110
      %v2112 = vsel %vm1401, %v2082, 0.0
      %2113 = vadd.xlane.f32.xlu0 %v2112
      %v2114 = vpop.xlane.xlu0 %2113
      %v2115 = vsel %vm1401, %v2083, 0.0
      %2116 = vadd.xlane.f32.xlu0 %v2115
      %v2117 = vpop.xlane.xlu0 %2116
      %v2118 = vsel %vm1401, %v2084, 0.0
      %2119 = vadd.xlane.f32.xlu0 %v2118
      %v2120 = vpop.xlane.xlu0 %2119
      %v2121 = vsel %vm1401, %v2085, 0.0
      %2122 = vadd.xlane.f32.xlu0 %v2121
      %v2123 = vpop.xlane.xlu0 %2122
      %v2124 = vsel %vm1401, %v2086, 0.0
      %2125 = vadd.xlane.f32.xlu0 %v2124
      %v2126 = vpop.xlane.xlu0 %2125
      %v2127 = vsel %vm1401, %v2087, 0.0
      %2128 = vadd.xlane.f32.xlu0 %v2127
      %v2129 = vpop.xlane.xlu0 %2128
      %v2130 = vsel %vm1401, %v2088, 0.0
      %2131 = vadd.xlane.f32.xlu0 %v2130
      %v2132 = vpop.xlane.xlu0 %2131
      %v2133 = vsel %vm1401, %v2089, 0.0
      %2134 = vadd.xlane.f32.xlu0 %v2133
      %v2135 = vpop.xlane.xlu0 %2134
      %v2136 = vsel %vm1401, %v2090, 0.0
      %2137 = vadd.xlane.f32.xlu0 %v2136
      %v2138 = vpop.xlane.xlu0 %2137
      %v2139 = vmul.f32 %v2093, %v1456
      %v2140 = vmul.f32 %v2096, %v1456
      %v2141 = vmul.f32 %v2099, %v1456
      %v2142 = vmul.f32 %v2102, %v1456
      %v2143 = vmul.f32 %v2105, %v1456
      %v2144 = vmul.f32 %v2108, %v1456
      %v2145 = vmul.f32 %v2111, %v1456
      %v2146 = vmul.f32 %v2114, %v1456
      %v2147 = vmul.f32 %v2117, %v1456
      %v2148 = vmul.f32 %v2120, %v1456
      %v2149 = vmul.f32 %v2123, %v1456
      %v2150 = vmul.f32 %v2126, %v1456
      %v2151 = vmul.f32 %v2129, %v1456
      %v2152 = vmul.f32 %v2132, %v1456
      %v2153 = vmul.f32 %v2135, %v1456
      %v2154 = vmul.f32 %v2138, %v1456
      %v2155 = vadd.f32 %v2139, 1e-05
      %v2156 = vadd.f32 %v2140, 1e-05
      %v2157 = vadd.f32 %v2141, 1e-05
      %v2158 = vadd.f32 %v2142, 1e-05
      %v2159 = vadd.f32 %v2143, 1e-05
      %v2160 = vadd.f32 %v2144, 1e-05
      %v2161 = vadd.f32 %v2145, 1e-05
      %v2162 = vadd.f32 %v2146, 1e-05
      %v2163 = vadd.f32 %v2147, 1e-05
      %v2164 = vadd.f32 %v2148, 1e-05
      %v2165 = vadd.f32 %v2149, 1e-05
      %v2166 = vadd.f32 %v2150, 1e-05
      %v2167 = vadd.f32 %v2151, 1e-05
      %v2168 = vadd.f32 %v2152, 1e-05
      %v2169 = vadd.f32 %v2153, 1e-05
      %v2170 = vadd.f32 %v2154, 1e-05
      %v2171 = vrsqrt.pop %v2155
      %v2172 = vmul.f32 %v2171, %v2155
      %v2173 = vmul.f32 %v2172, %v2171
      %v2174 = vmul.f32 0.5, %v2173
      %v2175 = vsub.f32 1.5, %v2174
      %v2176 = vmul.f32 %v2171, %v2175
      %vm2177 = vweird.f32 %v2155
      %vm2178 = vweird.f32 %v2171
      %vm2179 = vmor %vm2177, %vm2178
      %v2180 = vsel %vm2179, %v2171, %v2176
      %v2181 = vrsqrt.pop %v2156
      %v2182 = vmul.f32 %v2181, %v2156
      %v2183 = vmul.f32 %v2182, %v2181
      %v2184 = vmul.f32 0.5, %v2183
      %v2185 = vsub.f32 1.5, %v2184
      %v2186 = vmul.f32 %v2181, %v2185
      %vm2187 = vweird.f32 %v2156
      %vm2188 = vweird.f32 %v2181
      %vm2189 = vmor %vm2187, %vm2188
      %v2190 = vsel %vm2189, %v2181, %v2186
      %v2191 = vrsqrt.pop %v2157
      %v2192 = vmul.f32 %v2191, %v2157
      %v2193 = vmul.f32 %v2192, %v2191
      %v2194 = vmul.f32 0.5, %v2193
      %v2195 = vsub.f32 1.5, %v2194
      %v2196 = vmul.f32 %v2191, %v2195
      %vm2197 = vweird.f32 %v2157
      %vm2198 = vweird.f32 %v2191
      %vm2199 = vmor %vm2197, %vm2198
      %v2200 = vsel %vm2199, %v2191, %v2196
      %v2201 = vrsqrt.pop %v2158
      %v2202 = vmul.f32 %v2201, %v2158
      %v2203 = vmul.f32 %v2202, %v2201
      %v2204 = vmul.f32 0.5, %v2203
      %v2205 = vsub.f32 1.5, %v2204
      %v2206 = vmul.f32 %v2201, %v2205
      %vm2207 = vweird.f32 %v2158
      %vm2208 = vweird.f32 %v2201
      %vm2209 = vmor %vm2207, %vm2208
      %v2210 = vsel %vm2209, %v2201, %v2206
      %v2211 = vrsqrt.pop %v2159
      %v2212 = vmul.f32 %v2211, %v2159
      %v2213 = vmul.f32 %v2212, %v2211
      %v2214 = vmul.f32 0.5, %v2213
      %v2215 = vsub.f32 1.5, %v2214
      %v2216 = vmul.f32 %v2211, %v2215
      %vm2217 = vweird.f32 %v2159
      %vm2218 = vweird.f32 %v2211
      %vm2219 = vmor %vm2217, %vm2218
      %v2220 = vsel %vm2219, %v2211, %v2216
      %v2221 = vrsqrt.pop %v2160
      %v2222 = vmul.f32 %v2221, %v2160
      %v2223 = vmul.f32 %v2222, %v2221
      %v2224 = vmul.f32 0.5, %v2223
      %v2225 = vsub.f32 1.5, %v2224
      %v2226 = vmul.f32 %v2221, %v2225
      %vm2227 = vweird.f32 %v2160
      %vm2228 = vweird.f32 %v2221
      %vm2229 = vmor %vm2227, %vm2228
      %v2230 = vsel %vm2229, %v2221, %v2226
      %v2231 = vrsqrt.pop %v2161
      %v2232 = vmul.f32 %v2231, %v2161
      %v2233 = vmul.f32 %v2232, %v2231
      %v2234 = vmul.f32 0.5, %v2233
      %v2235 = vsub.f32 1.5, %v2234
      %v2236 = vmul.f32 %v2231, %v2235
      %vm2237 = vweird.f32 %v2161
      %vm2238 = vweird.f32 %v2231
      %vm2239 = vmor %vm2237, %vm2238
      %v2240 = vsel %vm2239, %v2231, %v2236
      %v2241 = vrsqrt.pop %v2162
      %v2242 = vmul.f32 %v2241, %v2162
      %v2243 = vmul.f32 %v2242, %v2241
      %v2244 = vmul.f32 0.5, %v2243
      %v2245 = vsub.f32 1.5, %v2244
      %v2246 = vmul.f32 %v2241, %v2245
      %vm2247 = vweird.f32 %v2162
      %vm2248 = vweird.f32 %v2241
      %vm2249 = vmor %vm2247, %vm2248
      %v2250 = vsel %vm2249, %v2241, %v2246
      %v2251 = vrsqrt.pop %v2163
      %v2252 = vmul.f32 %v2251, %v2163
      %v2253 = vmul.f32 %v2252, %v2251
      %v2254 = vmul.f32 0.5, %v2253
      %v2255 = vsub.f32 1.5, %v2254
      %v2256 = vmul.f32 %v2251, %v2255
      %vm2257 = vweird.f32 %v2163
      %vm2258 = vweird.f32 %v2251
      %vm2259 = vmor %vm2257, %vm2258
      %v2260 = vsel %vm2259, %v2251, %v2256
      %v2261 = vrsqrt.pop %v2164
      %v2262 = vmul.f32 %v2261, %v2164
      %v2263 = vmul.f32 %v2262, %v2261
      %v2264 = vmul.f32 0.5, %v2263
      %v2265 = vsub.f32 1.5, %v2264
      %v2266 = vmul.f32 %v2261, %v2265
      %vm2267 = vweird.f32 %v2164
      %vm2268 = vweird.f32 %v2261
      %vm2269 = vmor %vm2267, %vm2268
      %v2270 = vsel %vm2269, %v2261, %v2266
      %v2271 = vrsqrt.pop %v2165
      %v2272 = vmul.f32 %v2271, %v2165
      %v2273 = vmul.f32 %v2272, %v2271
      %v2274 = vmul.f32 0.5, %v2273
      %v2275 = vsub.f32 1.5, %v2274
      %v2276 = vmul.f32 %v2271, %v2275
      %vm2277 = vweird.f32 %v2165
      %vm2278 = vweird.f32 %v2271
      %vm2279 = vmor %vm2277, %vm2278
      %v2280 = vsel %vm2279, %v2271, %v2276
      %v2281 = vrsqrt.pop %v2166
      %v2282 = vmul.f32 %v2281, %v2166
      %v2283 = vmul.f32 %v2282, %v2281
      %v2284 = vmul.f32 0.5, %v2283
      %v2285 = vsub.f32 1.5, %v2284
      %v2286 = vmul.f32 %v2281, %v2285
      %vm2287 = vweird.f32 %v2166
      %vm2288 = vweird.f32 %v2281
      %vm2289 = vmor %vm2287, %vm2288
      %v2290 = vsel %vm2289, %v2281, %v2286
      %v2291 = vrsqrt.pop %v2167
      %v2292 = vmul.f32 %v2291, %v2167
      %v2293 = vmul.f32 %v2292, %v2291
      %v2294 = vmul.f32 0.5, %v2293
      %v2295 = vsub.f32 1.5, %v2294
      %v2296 = vmul.f32 %v2291, %v2295
      %vm2297 = vweird.f32 %v2167
      %vm2298 = vweird.f32 %v2291
      %vm2299 = vmor %vm2297, %vm2298
      %v2300 = vsel %vm2299, %v2291, %v2296
      %v2301 = vrsqrt.pop %v2168
      %v2302 = vmul.f32 %v2301, %v2168
      %v2303 = vmul.f32 %v2302, %v2301
      %v2304 = vmul.f32 0.5, %v2303
      %v2305 = vsub.f32 1.5, %v2304
      %v2306 = vmul.f32 %v2301, %v2305
      %vm2307 = vweird.f32 %v2168
      %vm2308 = vweird.f32 %v2301
      %vm2309 = vmor %vm2307, %vm2308
      %v2310 = vsel %vm2309, %v2301, %v2306
      %v2311 = vrsqrt.pop %v2169
      %v2312 = vmul.f32 %v2311, %v2169
      %v2313 = vmul.f32 %v2312, %v2311
      %v2314 = vmul.f32 0.5, %v2313
      %v2315 = vsub.f32 1.5, %v2314
      %v2316 = vmul.f32 %v2311, %v2315
      %vm2317 = vweird.f32 %v2169
      %vm2318 = vweird.f32 %v2311
      %vm2319 = vmor %vm2317, %vm2318
      %v2320 = vsel %vm2319, %v2311, %v2316
      %v2321 = vrsqrt.pop %v2170
      %v2322 = vmul.f32 %v2321, %v2170
      %v2323 = vmul.f32 %v2322, %v2321
      %v2324 = vmul.f32 0.5, %v2323
      %v2325 = vsub.f32 1.5, %v2324
      %v2326 = vmul.f32 %v2321, %v2325
      %vm2327 = vweird.f32 %v2170
      %vm2328 = vweird.f32 %v2321
      %vm2329 = vmor %vm2327, %vm2328
      %v2330 = vsel %vm2329, %v2321, %v2326
      %v2331 = vmul.f32 %v2059, %v2180
      %v2332 = vmul.f32 %v2060, %v2190
      %v2333 = vmul.f32 %v2061, %v2200
      %v2334 = vmul.f32 %v2062, %v2210
      %v2335 = vmul.f32 %v2063, %v2220
      %v2336 = vmul.f32 %v2064, %v2230
      %v2337 = vmul.f32 %v2065, %v2240
      %v2338 = vmul.f32 %v2066, %v2250
      %v2339 = vmul.f32 %v2067, %v2260
      %v2340 = vmul.f32 %v2068, %v2270
      %v2341 = vmul.f32 %v2069, %v2280
      %v2342 = vmul.f32 %v2070, %v2290
      %v2343 = vmul.f32 %v2071, %v2300
      %v2344 = vmul.f32 %v2072, %v2310
      %v2345 = vmul.f32 %v2073, %v2320
      %v2346 = vmul.f32 %v2074, %v2330
      %v2347 = vsel %vm1401, %v2331, 0.0
      %v2348 = vsel %vm1401, %v2332, 0.0
      %v2349 = vsel %vm1401, %v2333, 0.0
      %v2350 = vsel %vm1401, %v2334, 0.0
      %v2351 = vsel %vm1401, %v2335, 0.0
      %v2352 = vsel %vm1401, %v2336, 0.0
      %v2353 = vsel %vm1401, %v2337, 0.0
      %v2354 = vsel %vm1401, %v2338, 0.0
      %v2355 = vsel %vm1401, %v2339, 0.0
      %v2356 = vsel %vm1401, %v2340, 0.0
      %v2357 = vsel %vm1401, %v2341, 0.0
      %v2358 = vsel %vm1401, %v2342, 0.0
      %v2359 = vsel %vm1401, %v2343, 0.0
      %v2360 = vsel %vm1401, %v2344, 0.0
      %v2361 = vsel %vm1401, %v2345, 0.0
      %v2362 = vsel %vm1401, %v2346, 0.0
      %2363 = vst [vmem:[%s332] sm:$0xff] %v2347
      %2364 = vst [vmem:[%s332 + $0x8] sm:$0xff] %v2348
      %2365 = vst [vmem:[%s332 + $0x10] sm:$0xff] %v2349
      %2366 = vst [vmem:[%s332 + $0x18] sm:$0xff] %v2350
      %2367 = vst [vmem:[%s332 + $0x20] sm:$0xff] %v2351
      %2368 = vst [vmem:[%s332 + $0x28] sm:$0xff] %v2352
      %2369 = vst [vmem:[%s332 + $0x30] sm:$0xff] %v2353
      %2370 = vst [vmem:[%s332 + $0x38] sm:$0xff] %v2354
      %2371 = vst [vmem:[%s332 + $0x40] sm:$0xff] %v2355
      %2372 = vst [vmem:[%s332 + $0x48] sm:$0xff] %v2356
      %2373 = vst [vmem:[%s332 + $0x50] sm:$0xff] %v2357
      %2374 = vst [vmem:[%s332 + $0x58] sm:$0xff] %v2358
      %2375 = vst [vmem:[%s332 + $0x60] sm:$0xff] %v2359
      %2376 = vst [vmem:[%s332 + $0x68] sm:$0xff] %v2360
      %2377 = vst [vmem:[%s332 + $0x70] sm:$0xff] %v2361
      %2378 = vst [vmem:[%s332 + $0x78] sm:$0xff] %v2362
      %s2379 = smul.u32 16, %s19
      %p2380 = scmp.lt.s32.totalorder %s2379, 31
      %s2381 = scalar_select %p2380, %s2379, 31
      %s2382 = smul.addr %s2381, 8
      %s2383 = scalar_lea.vmem %s8, %s2382
      // Predicated region
      $region53: #{gated_block.3} parent=51 // pred_check
        %p2384 = pneg %p215
      $region54: #{gated_block.3} parent=51 // pred_check_branch
        %2386 = sbr.rel (%p2384) target = $region56
      $region55: #{gated_block.3} parent=51 // pred_region
        %s2387 = smul.u32 16, %s19
      $region56: #{gated_block.3} parent=51 // pred_fallthru
        _
    $region52: #{gated_block.3} parent=5 // pred_fallthru
      _
    %p2388 = scmp.le.s32.totalorder 2, %s14
    // Predicated region
    $region57: #{gated_block.3} parent=5 // pred_check
      %p2389 = pneg %p2388
    $region58: #{gated_block.3} parent=5 // pred_check_branch
      %2391 = sbr.rel (%p2389) target = $region60
    $region59: #{gated_block.3} parent=5 // pred_region
      %s2392 = ssub.s32 %s14, 2
      // Predicated region
      $region61: #{gated_block.3} parent=59 // pred_check
        %p2393 = pneg %p221
      $region62: #{gated_block.3} parent=59 // pred_check_branch
        %2395 = sbr.rel (%p2393) target = $region64
      $region63: #{gated_block.3} parent=59 // pred_region
        %s2396 = smul.u32 16, %s20
        %p2397 = scmp.lt.s32.totalorder %s2396, 31
        %s2398 = scalar_select %p2397, %s2396, 31
        %s2399 = smul.addr %s2398, 8
        %s2400 = scalar_lea.vmem %s8, %s2399
      $region64: #{gated_block.3} parent=59 // pred_fallthru
        _
    $region60: #{gated_block.3} parent=5 // pred_fallthru
      _
  $region6: #{gated_block.3} parent=0 // loop_footer
    %s18 = sadd.s32 1, %s14
  $region7: #{gated_block.3} parent=0 // loop_footer_branch
    %13 = sbr.rel target = $region3
  $region8: #{gated_block.3} parent=0 // loop_exit
    _

</llo_original>
